<compile_context>
chip_gen: v7x
topology: tpu7x:2x2x1
jax: 0.10.0
libtpu: 0.0.40
codegen_flags: <defaults>
</compile_context>

<pallas_src>
import jax
import jax.numpy as jnp
import numpy as np
from jax.experimental import pallas as pl
from jax.experimental.pallas import tpu as pltpu

_EPS = 1e-5


def _round_up(v, m):
    return (v + m - 1) // m * m


def _make_conv_gn_relu_kernel(K, Wp, S, use_gn, use_relu):
    """Build the fused conv + GroupNorm + ReLU kernel for static geometry."""
    taps = [(kh, kw) for kh in range(K) for kw in range(K)]

    def kernel(w_ref, a_ref, g_ref, b_ref, m_ref, x_ref, o_ref):
        # w_ref: VMEM (K*K, Coutp, Cinp)  per-tap weight matrices
        # a_ref: VMEM (Coutp, Coutp)      group-membership matrix / (Cg*Ho*Wo)
        # g_ref, b_ref: VMEM (Coutp, 1)   GN gamma / beta (or conv bias if no GN)
        # m_ref: VMEM (1, S)              1.0 on valid output columns, 0.0 on pad
        # x_ref: VMEM (1, Cinp, L)        flattened zero-padded input (one sample)
        # o_ref: VMEM (1, Coutp, S)       fused output (valid + pad columns)
        coutp = o_ref.shape[1]
        x = x_ref[0]                                     # (Cinp, L), loaded once

        acc = jnp.zeros((coutp, S), jnp.float32)
        for t, (kh, kw) in enumerate(taps):
            off = kh * Wp + kw                           # static lane offset
            acc = acc + jnp.dot(w_ref[t], x[:, off:off + S],
                                preferred_element_type=jnp.float32)

        if use_gn:
            mask = m_ref[...]                            # (1, S)
            zm = acc * mask                              # zero the pad columns
            # Per-channel sums (lane reduction, XLU) then a tiny group-membership
            # matmul spreads each group's mean back onto its channel rows without
            # any cross-sublane reshape of the (Coutp, S) activation tile.
            csum = jnp.sum(zm, axis=1, keepdims=True)            # (Coutp, 1)
            csq = jnp.sum(zm * acc, axis=1, keepdims=True)       # (Coutp, 1)
            mean = jnp.dot(a_ref[...], csum,
                           preferred_element_type=jnp.float32)   # (Coutp, 1)
            meansq = jnp.dot(a_ref[...], csq,
                             preferred_element_type=jnp.float32)
            var = meansq - mean * mean
            inv = jax.lax.rsqrt(var + _EPS)
            y = (acc - mean) * (inv * g_ref[...]) + b_ref[...]
        else:
            y = acc + b_ref[...]                         # conv-bias path
        if use_relu:
            y = jnp.maximum(y, 0.0)
        o_ref[0] = y.astype(o_ref.dtype)

    return kernel


def conv2d_gn_forward(x, params, *, kernel_size, stride=1, padding=0,
                      group_channel=8, gn=True, relu=True):
    """Fused Pallas forward of Conv2d_gn (NCHW, float32)."""
    if stride != 1:
        # TODO(synk): stride > 1 needs polyphase decomposition of the lane-shift
        # conv taps; not implemented in the fused path.
        raise NotImplementedError("conv2d_gn_forward supports stride=1 only")

    w = params["w"].astype(jnp.float32)                  # (Cout, Cin, K, K)
    N, Cin, H, W = x.shape
    Cout = w.shape[0]
    K, P = kernel_size, padding
    Ho = H + 2 * P - K + 1
    Wo = W + 2 * P - K + 1
    Hp, Wp = H + 2 * P, W + 2 * P
    SWp = Ho * Wp                                        # flat spatial (valid rows)
    S = _round_up(SWp, 128)                              # lane-dense output width
    Cinp = _round_up(Cin, 8)                             # sublane-aligned channels
    Coutp = _round_up(Cout, 8)
    max_off = (K - 1) * (Wp + 1)                         # largest tap lane offset
    L = _round_up(max_off + S, 128)                      # input lane width + tail

    # ---- host glue: one pad of x (channels + spatial), flatten spatial ----
    xp = jnp.pad(x.astype(jnp.float32),
                 ((0, 0), (0, Cinp - Cin), (P, P), (P, P)))
    x_flat = jnp.pad(xp.reshape(N, Cinp, Hp * Wp),
                     ((0, 0), (0, 0), (0, L - Hp * Wp)))

    # per-tap weight matrices: (K*K, Coutp, Cinp); zero rows/cols for padding
    w_taps = jnp.pad(w, ((0, Coutp - Cout), (0, Cinp - Cin), (0, 0), (0, 0)))
    w_taps = jnp.transpose(w_taps, (2, 3, 0, 1)).reshape(K * K, Coutp, Cinp)

    # GroupNorm group-membership matrix (zero for padded channels -> exact stats)
    G = max(1, Cout // group_channel)
    assert Cout % G == 0, "GroupNorm requires Cout divisible by num_groups"
    Cg = Cout // G
    gidx = jnp.arange(Cout) // Cg
    amat = (gidx[:, None] == gidx[None, :]).astype(jnp.float32) / (Cg * Ho * Wo)
    amat = jnp.pad(amat, ((0, Coutp - Cout), (0, Coutp - Cout)))

    if gn:
        g_col = jnp.pad(params["gamma"].astype(jnp.float32),
                        (0, Coutp - Cout))[:, None]
        b_col = jnp.pad(params["beta"].astype(jnp.float32),
                        (0, Coutp - Cout))[:, None]
    else:
        g_col = jnp.ones((Coutp, 1), jnp.float32)
        b_col = jnp.pad(params["b"].astype(jnp.float32),
                        (0, Coutp - Cout))[:, None]

    # validity mask over the S flattened output columns
    cols = jnp.arange(S)
    mask = ((cols < SWp) & ((cols % Wp) < Wo)).astype(jnp.float32)[None, :]

    kernel = _make_conv_gn_relu_kernel(K, Wp, S, gn, relu)
    out_flat = pl.pallas_call(
        kernel,
        out_shape=jax.ShapeDtypeStruct((N, Coutp, S), jnp.float32),
        grid=(N,),
        in_specs=[
            pl.BlockSpec((K * K, Coutp, Cinp), lambda n: (0, 0, 0)),
            pl.BlockSpec((Coutp, Coutp), lambda n: (0, 0)),
            pl.BlockSpec((Coutp, 1), lambda n: (0, 0)),
            pl.BlockSpec((Coutp, 1), lambda n: (0, 0)),
            pl.BlockSpec((1, S), lambda n: (0, 0)),
            pl.BlockSpec((1, Cinp, L), lambda n: (n, 0, 0)),
        ],
        out_specs=pl.BlockSpec((1, Coutp, S), lambda n: (n, 0, 0)),
        compiler_params=pltpu.CompilerParams(
            dimension_semantics=("parallel",)),
    )(w_taps, amat, g_col, b_col, mask, x_flat)

    # drop padded channels / padded columns; only host-side slicing remains.
    out = out_flat[:, :Cout, :SWp].reshape(N, Cout, Ho, Wp)[:, :, :, :Wo]
    return out


def reference_forward(x, params, *, kernel_size, stride=1, padding=0,
                      group_channel=8, gn=True, relu=True):
    """Pure-JAX reference matching PyTorch Conv2d_gn semantics."""
    w = params["w"].astype(jnp.float32)
    z = jax.lax.conv_general_dilated(
        x.astype(jnp.float32), w,
        window_strides=(stride, stride),
        padding=[(padding, padding)] * 2,
        dimension_numbers=("NCHW", "OIHW", "NCHW"),
        precision=jax.lax.Precision.HIGHEST)
    if gn:
        Cout = w.shape[0]
        G = max(1, Cout // group_channel)
        N, C, Ho, Wo = z.shape
        zz = z.reshape(N, G, -1)
        m = zz.mean(axis=2, keepdims=True)
        v = zz.var(axis=2, keepdims=True)                # biased, like PyTorch GN
        zn = ((zz - m) / jnp.sqrt(v + _EPS)).reshape(N, C, Ho, Wo)
        z = zn * params["gamma"][None, :, None, None] \
            + params["beta"][None, :, None, None]
    else:
        z = z + params["b"][None, :, None, None]
    if relu:
        z = jnp.maximum(z, 0.0)
    return z


if __name__ == "__main__":
    key = jax.random.PRNGKey(0)
    ks = jax.random.split(key, 8)

    # Config 1: 3x3 conv, pad=1, Cout=8 -> one GroupNorm group.
    N, Cin, Cout, H, W = 2, 4, 8, 16, 16
    x = jax.random.normal(ks[0], (N, Cin, H, W), jnp.float32)
    params = {
        "w": jax.random.normal(ks[1], (Cout, Cin, 3, 3), jnp.float32) * 0.2,
        "gamma": jax.random.uniform(ks[2], (Cout,), jnp.float32, 0.5, 1.5),
        "beta": jax.random.normal(ks[3], (Cout,), jnp.float32) * 0.1,
    }
    out = jax.block_until_ready(
        conv2d_gn_forward(x, params, kernel_size=3, stride=1, padding=1))
    ref = jax.block_until_ready(
        reference_forward(x, params, kernel_size=3, stride=1, padding=1))
    assert out.shape == ref.shape == (N, Cout, H, W), (out.shape, ref.shape)
    np.testing.assert_allclose(np.asarray(out), np.asarray(ref),
                               rtol=1e-3, atol=1e-3)

    # Config 2: 5x5 conv, pad=2, Cout=16 -> two GroupNorm groups.
    Cin2, Cout2 = 8, 16
    x2 = jax.random.normal(ks[4], (N, Cin2, H, W), jnp.float32)
    params2 = {
        "w": jax.random.normal(ks[5], (Cout2, Cin2, 5, 5), jnp.float32) * 0.1,
        "gamma": jax.random.uniform(ks[6], (Cout2,), jnp.float32, 0.5, 1.5),
        "beta": jax.random.normal(ks[7], (Cout2,), jnp.float32) * 0.1,
    }
    out2 = jax.block_until_ready(
        conv2d_gn_forward(x2, params2, kernel_size=5, stride=1, padding=2))
    ref2 = jax.block_until_ready(
        reference_forward(x2, params2, kernel_size=5, stride=1, padding=2))
    assert out2.shape == ref2.shape == (N, Cout2, H, W)
    np.testing.assert_allclose(np.asarray(out2), np.asarray(ref2),
                               rtol=1e-3, atol=1e-3)

    print("KERNEL_OK")
</pallas_src>

<mosaic_0001>
module attributes {stable_mosaic.version = 11 : i64} {
  func.func @kernel(%arg0: i32, %arg1: memref<9x8x8xf32, #tpu.memory_space<vmem>>, %arg2: memref<8x8xf32, #tpu.memory_space<vmem>>, %arg3: memref<8x1xf32, #tpu.memory_space<vmem>>, %arg4: memref<8x1xf32, #tpu.memory_space<vmem>>, %arg5: memref<1x384xf32, #tpu.memory_space<vmem>>, %arg6: memref<1x8x512xf32, #tpu.memory_space<vmem>>, %arg7: memref<1x8x384xf32, #tpu.memory_space<vmem>>) attributes {dimension_semantics = [#tpu.dimension_semantics<parallel>], iteration_bounds = array<i64: 2>, scalar_prefetch = 0 : i64, scratch_operands = 0 : i64, tpu.core_type = #tpu.core_type<tc>, window_params = [{pipeline_mode = #tpu.pipeline_mode<synchronous>, transform_indices = @transform_0, window_bounds = array<i64: 9, 8, 8>}, {pipeline_mode = #tpu.pipeline_mode<synchronous>, transform_indices = @transform_1, window_bounds = array<i64: 8, 8>}, {pipeline_mode = #tpu.pipeline_mode<synchronous>, transform_indices = @transform_2, window_bounds = array<i64: 8, 1>}, {pipeline_mode = #tpu.pipeline_mode<synchronous>, transform_indices = @transform_3, window_bounds = array<i64: 8, 1>}, {pipeline_mode = #tpu.pipeline_mode<synchronous>, transform_indices = @transform_4, window_bounds = array<i64: 1, 384>}, {transform_indices = @transform_5, window_bounds = array<i64: 1, 8, 512>}, {transform_indices = @transform_6, window_bounds = array<i64: 1, 8, 384>}]} {
    %c0 = arith.constant 0 : index
    %c0_0 = arith.constant 0 : index
    %c0_1 = arith.constant 0 : index
    %0 = vector.load %arg6[%c0, %c0_0, %c0_1] : memref<1x8x512xf32, #tpu.memory_space<vmem>>, vector<1x8x512xf32>
    %1 = vector.shape_cast %0 : vector<1x8x512xf32> to vector<8x512xf32>
    %cst = arith.constant 0.000000e+00 : f32
    %2 = vector.broadcast %cst : f32 to vector<8x384xf32>
    %c0_2 = arith.constant 0 : index
    %c0_3 = arith.constant 0 : index
    %c0_4 = arith.constant 0 : index
    %3 = vector.load %arg1[%c0_2, %c0_3, %c0_4] : memref<9x8x8xf32, #tpu.memory_space<vmem>>, vector<1x8x8xf32>
    %4 = vector.shape_cast %3 : vector<1x8x8xf32> to vector<8x8xf32>
    %5 = vector.extract_strided_slice %1 {offsets = [0, 0], sizes = [8, 384], strides = [1, 1]} : vector<8x512xf32> to vector<8x384xf32>
    %cst_5 = arith.constant dense<0.000000e+00> : vector<8x384xf32>
    %6 = tpu.matmul %4, %5, %cst_5 {dimension_numbers = #tpu.dot_dimension_numbers<[1], [0], [0], [1], [0, 0, 1, 1], [], []>} : vector<8x8xf32>, vector<8x384xf32>, vector<8x384xf32> -> vector<8x384xf32>
    %7 = arith.addf %2, %6 : vector<8x384xf32>
    %c1 = arith.constant 1 : index
    %c0_6 = arith.constant 0 : index
    %c0_7 = arith.constant 0 : index
    %8 = vector.load %arg1[%c1, %c0_6, %c0_7] : memref<9x8x8xf32, #tpu.memory_space<vmem>>, vector<1x8x8xf32>
    %9 = vector.shape_cast %8 : vector<1x8x8xf32> to vector<8x8xf32>
    %10 = vector.extract_strided_slice %1 {offsets = [0, 1], sizes = [8, 384], strides = [1, 1]} : vector<8x512xf32> to vector<8x384xf32>
    %cst_8 = arith.constant dense<0.000000e+00> : vector<8x384xf32>
    %11 = tpu.matmul %9, %10, %cst_8 {dimension_numbers = #tpu.dot_dimension_numbers<[1], [0], [0], [1], [0, 0, 1, 1], [], []>} : vector<8x8xf32>, vector<8x384xf32>, vector<8x384xf32> -> vector<8x384xf32>
    %12 = arith.addf %7, %11 : vector<8x384xf32>
    %c2 = arith.constant 2 : index
    %c0_9 = arith.constant 0 : index
    %c0_10 = arith.constant 0 : index
    %13 = vector.load %arg1[%c2, %c0_9, %c0_10] : memref<9x8x8xf32, #tpu.memory_space<vmem>>, vector<1x8x8xf32>
    %14 = vector.shape_cast %13 : vector<1x8x8xf32> to vector<8x8xf32>
    %15 = vector.extract_strided_slice %1 {offsets = [0, 2], sizes = [8, 384], strides = [1, 1]} : vector<8x512xf32> to vector<8x384xf32>
    %cst_11 = arith.constant dense<0.000000e+00> : vector<8x384xf32>
    %16 = tpu.matmul %14, %15, %cst_11 {dimension_numbers = #tpu.dot_dimension_numbers<[1], [0], [0], [1], [0, 0, 1, 1], [], []>} : vector<8x8xf32>, vector<8x384xf32>, vector<8x384xf32> -> vector<8x384xf32>
    %17 = arith.addf %12, %16 : vector<8x384xf32>
    %c3 = arith.constant 3 : index
    %c0_12 = arith.constant 0 : index
    %c0_13 = arith.constant 0 : index
    %18 = vector.load %arg1[%c3, %c0_12, %c0_13] : memref<9x8x8xf32, #tpu.memory_space<vmem>>, vector<1x8x8xf32>
    %19 = vector.shape_cast %18 : vector<1x8x8xf32> to vector<8x8xf32>
    %20 = vector.extract_strided_slice %1 {offsets = [0, 18], sizes = [8, 384], strides = [1, 1]} : vector<8x512xf32> to vector<8x384xf32>
    %cst_14 = arith.constant dense<0.000000e+00> : vector<8x384xf32>
    %21 = tpu.matmul %19, %20, %cst_14 {dimension_numbers = #tpu.dot_dimension_numbers<[1], [0], [0], [1], [0, 0, 1, 1], [], []>} : vector<8x8xf32>, vector<8x384xf32>, vector<8x384xf32> -> vector<8x384xf32>
    %22 = arith.addf %17, %21 : vector<8x384xf32>
    %c4 = arith.constant 4 : index
    %c0_15 = arith.constant 0 : index
    %c0_16 = arith.constant 0 : index
    %23 = vector.load %arg1[%c4, %c0_15, %c0_16] : memref<9x8x8xf32, #tpu.memory_space<vmem>>, vector<1x8x8xf32>
    %24 = vector.shape_cast %23 : vector<1x8x8xf32> to vector<8x8xf32>
    %25 = vector.extract_strided_slice %1 {offsets = [0, 19], sizes = [8, 384], strides = [1, 1]} : vector<8x512xf32> to vector<8x384xf32>
    %cst_17 = arith.constant dense<0.000000e+00> : vector<8x384xf32>
    %26 = tpu.matmul %24, %25, %cst_17 {dimension_numbers = #tpu.dot_dimension_numbers<[1], [0], [0], [1], [0, 0, 1, 1], [], []>} : vector<8x8xf32>, vector<8x384xf32>, vector<8x384xf32> -> vector<8x384xf32>
    %27 = arith.addf %22, %26 : vector<8x384xf32>
    %c5 = arith.constant 5 : index
    %c0_18 = arith.constant 0 : index
    %c0_19 = arith.constant 0 : index
    %28 = vector.load %arg1[%c5, %c0_18, %c0_19] : memref<9x8x8xf32, #tpu.memory_space<vmem>>, vector<1x8x8xf32>
    %29 = vector.shape_cast %28 : vector<1x8x8xf32> to vector<8x8xf32>
    %30 = vector.extract_strided_slice %1 {offsets = [0, 20], sizes = [8, 384], strides = [1, 1]} : vector<8x512xf32> to vector<8x384xf32>
    %cst_20 = arith.constant dense<0.000000e+00> : vector<8x384xf32>
    %31 = tpu.matmul %29, %30, %cst_20 {dimension_numbers = #tpu.dot_dimension_numbers<[1], [0], [0], [1], [0, 0, 1, 1], [], []>} : vector<8x8xf32>, vector<8x384xf32>, vector<8x384xf32> -> vector<8x384xf32>
    %32 = arith.addf %27, %31 : vector<8x384xf32>
    %c6 = arith.constant 6 : index
    %c0_21 = arith.constant 0 : index
    %c0_22 = arith.constant 0 : index
    %33 = vector.load %arg1[%c6, %c0_21, %c0_22] : memref<9x8x8xf32, #tpu.memory_space<vmem>>, vector<1x8x8xf32>
    %34 = vector.shape_cast %33 : vector<1x8x8xf32> to vector<8x8xf32>
    %35 = vector.extract_strided_slice %1 {offsets = [0, 36], sizes = [8, 384], strides = [1, 1]} : vector<8x512xf32> to vector<8x384xf32>
    %cst_23 = arith.constant dense<0.000000e+00> : vector<8x384xf32>
    %36 = tpu.matmul %34, %35, %cst_23 {dimension_numbers = #tpu.dot_dimension_numbers<[1], [0], [0], [1], [0, 0, 1, 1], [], []>} : vector<8x8xf32>, vector<8x384xf32>, vector<8x384xf32> -> vector<8x384xf32>
    %37 = arith.addf %32, %36 : vector<8x384xf32>
    %c7 = arith.constant 7 : index
    %c0_24 = arith.constant 0 : index
    %c0_25 = arith.constant 0 : index
    %38 = vector.load %arg1[%c7, %c0_24, %c0_25] : memref<9x8x8xf32, #tpu.memory_space<vmem>>, vector<1x8x8xf32>
    %39 = vector.shape_cast %38 : vector<1x8x8xf32> to vector<8x8xf32>
    %40 = vector.extract_strided_slice %1 {offsets = [0, 37], sizes = [8, 384], strides = [1, 1]} : vector<8x512xf32> to vector<8x384xf32>
    %cst_26 = arith.constant dense<0.000000e+00> : vector<8x384xf32>
    %41 = tpu.matmul %39, %40, %cst_26 {dimension_numbers = #tpu.dot_dimension_numbers<[1], [0], [0], [1], [0, 0, 1, 1], [], []>} : vector<8x8xf32>, vector<8x384xf32>, vector<8x384xf32> -> vector<8x384xf32>
    %42 = arith.addf %37, %41 : vector<8x384xf32>
    %c8 = arith.constant 8 : index
    %c0_27 = arith.constant 0 : index
    %c0_28 = arith.constant 0 : index
    %43 = vector.load %arg1[%c8, %c0_27, %c0_28] : memref<9x8x8xf32, #tpu.memory_space<vmem>>, vector<1x8x8xf32>
    %44 = vector.shape_cast %43 : vector<1x8x8xf32> to vector<8x8xf32>
    %45 = vector.extract_strided_slice %1 {offsets = [0, 38], sizes = [8, 384], strides = [1, 1]} : vector<8x512xf32> to vector<8x384xf32>
    %cst_29 = arith.constant dense<0.000000e+00> : vector<8x384xf32>
    %46 = tpu.matmul %44, %45, %cst_29 {dimension_numbers = #tpu.dot_dimension_numbers<[1], [0], [0], [1], [0, 0, 1, 1], [], []>} : vector<8x8xf32>, vector<8x384xf32>, vector<8x384xf32> -> vector<8x384xf32>
    %47 = arith.addf %42, %46 : vector<8x384xf32>
    %c0_30 = arith.constant 0 : index
    %c0_31 = arith.constant 0 : index
    %48 = vector.load %arg5[%c0_30, %c0_31] : memref<1x384xf32, #tpu.memory_space<vmem>>, vector<1x384xf32>
    %49 = vector.broadcast %48 : vector<1x384xf32> to vector<8x384xf32>
    %50 = arith.mulf %47, %49 : vector<8x384xf32>
    %cst_32 = arith.constant dense<0.000000e+00> : vector<8xf32>
    %51 = vector.multi_reduction <add>, %50, %cst_32 [1] : vector<8x384xf32> to vector<8xf32>
    %52 = vector.shape_cast %51 : vector<8xf32> to vector<8x1xf32>
    %53 = arith.mulf %50, %47 : vector<8x384xf32>
    %cst_33 = arith.constant dense<0.000000e+00> : vector<8xf32>
    %54 = vector.multi_reduction <add>, %53, %cst_33 [1] : vector<8x384xf32> to vector<8xf32>
    %55 = vector.shape_cast %54 : vector<8xf32> to vector<8x1xf32>
    %c0_34 = arith.constant 0 : index
    %c0_35 = arith.constant 0 : index
    %56 = vector.load %arg2[%c0_34, %c0_35] : memref<8x8xf32, #tpu.memory_space<vmem>>, vector<8x8xf32>
    %cst_36 = arith.constant dense<0.000000e+00> : vector<8x1xf32>
    %57 = tpu.matmul %56, %52, %cst_36 {dimension_numbers = #tpu.dot_dimension_numbers<[1], [0], [0], [1], [0, 0, 1, 1], [], []>} : vector<8x8xf32>, vector<8x1xf32>, vector<8x1xf32> -> vector<8x1xf32>
    %c0_37 = arith.constant 0 : index
    %c0_38 = arith.constant 0 : index
    %58 = vector.load %arg2[%c0_37, %c0_38] : memref<8x8xf32, #tpu.memory_space<vmem>>, vector<8x8xf32>
    %cst_39 = arith.constant dense<0.000000e+00> : vector<8x1xf32>
    %59 = tpu.matmul %58, %55, %cst_39 {dimension_numbers = #tpu.dot_dimension_numbers<[1], [0], [0], [1], [0, 0, 1, 1], [], []>} : vector<8x8xf32>, vector<8x1xf32>, vector<8x1xf32> -> vector<8x1xf32>
    %60 = arith.mulf %57, %57 : vector<8x1xf32>
    %61 = arith.subf %59, %60 : vector<8x1xf32>
    %cst_40 = arith.constant 9.99999974E-6 : f32
    %62 = vector.broadcast %cst_40 : f32 to vector<8x1xf32>
    %63 = arith.addf %61, %62 : vector<8x1xf32>
    %64 = math.rsqrt %63 : vector<8x1xf32>
    %65 = vector.broadcast %57 : vector<8x1xf32> to vector<8x384xf32>
    %66 = arith.subf %47, %65 : vector<8x384xf32>
    %c0_41 = arith.constant 0 : index
    %c0_42 = arith.constant 0 : index
    %67 = vector.load %arg3[%c0_41, %c0_42] : memref<8x1xf32, #tpu.memory_space<vmem>>, vector<8x1xf32>
    %68 = arith.mulf %64, %67 : vector<8x1xf32>
    %69 = vector.broadcast %68 : vector<8x1xf32> to vector<8x384xf32>
    %70 = arith.mulf %66, %69 : vector<8x384xf32>
    %c0_43 = arith.constant 0 : index
    %c0_44 = arith.constant 0 : index
    %71 = vector.load %arg4[%c0_43, %c0_44] : memref<8x1xf32, #tpu.memory_space<vmem>>, vector<8x1xf32>
    %72 = vector.broadcast %71 : vector<8x1xf32> to vector<8x384xf32>
    %73 = arith.addf %70, %72 : vector<8x384xf32>
    %cst_45 = arith.constant 0.000000e+00 : f32
    %74 = vector.broadcast %cst_45 : f32 to vector<8x384xf32>
    %75 = arith.maximumf %73, %74 : vector<8x384xf32>
    %c0_46 = arith.constant 0 : index
    %c0_47 = arith.constant 0 : index
    %c0_48 = arith.constant 0 : index
    %76 = vector.load %arg7[%c0_46, %c0_47, %c0_48] : memref<1x8x384xf32, #tpu.memory_space<vmem>>, vector<1x8x384xf32>
    %77 = vector.shape_cast %76 : vector<1x8x384xf32> to vector<8x384xf32>
    %78 = vector.shape_cast %75 : vector<8x384xf32> to vector<1x8x384xf32>
    tpu.vector_store %arg7[%c0_46, %c0_47, %c0_48], %78 {strides = array<i32>} : memref<1x8x384xf32, #tpu.memory_space<vmem>>, vector<1x8x384xf32>,
    return
  }
  func.func @transform_0(%arg0: i32) -> (i32, i32, i32) {
    %c0_i32 = arith.constant 0 : i32
    %c0_i32_0 = arith.constant 0 : i32
    %c0_i32_1 = arith.constant 0 : i32
    %c0_i32_2 = arith.constant 0 : i32
    return %c0_i32, %c0_i32_0, %c0_i32_1 : i32, i32, i32
  }
  func.func @transform_1(%arg0: i32) -> (i32, i32) {
    %c0_i32 = arith.constant 0 : i32
    %c0_i32_0 = arith.constant 0 : i32
    %c0_i32_1 = arith.constant 0 : i32
    return %c0_i32, %c0_i32_0 : i32, i32
  }
  func.func @transform_2(%arg0: i32) -> (i32, i32) {
    %c0_i32 = arith.constant 0 : i32
    %c0_i32_0 = arith.constant 0 : i32
    %c0_i32_1 = arith.constant 0 : i32
    return %c0_i32, %c0_i32_0 : i32, i32
  }
  func.func @transform_3(%arg0: i32) -> (i32, i32) {
    %c0_i32 = arith.constant 0 : i32
    %c0_i32_0 = arith.constant 0 : i32
    %c0_i32_1 = arith.constant 0 : i32
    return %c0_i32, %c0_i32_0 : i32, i32
  }
  func.func @transform_4(%arg0: i32) -> (i32, i32) {
    %c0_i32 = arith.constant 0 : i32
    %c0_i32_0 = arith.constant 0 : i32
    %c0_i32_1 = arith.constant 0 : i32
    return %c0_i32, %c0_i32_0 : i32, i32
  }
  func.func @transform_5(%arg0: i32) -> (i32, i32, i32) {
    %c0_i32 = arith.constant 0 : i32
    %c0_i32_0 = arith.constant 0 : i32
    %c0_i32_1 = arith.constant 0 : i32
    return %arg0, %c0_i32, %c0_i32_0 : i32, i32, i32
  }
  func.func @transform_6(%arg0: i32) -> (i32, i32, i32) {
    %c0_i32 = arith.constant 0 : i32
    %c0_i32_0 = arith.constant 0 : i32
    %c0_i32_1 = arith.constant 0 : i32
    return %arg0, %c0_i32, %c0_i32_0 : i32, i32, i32
  }
}

</mosaic_0001>

<llo_original>
// kernel: tpu_custom_call.1
$region0: #{tpu_custom_call.1}
  #allocation0 [shape = 'u32[]', space=smem, size = 0x4, offset = 0x4, fixed_abs, tag = 'smem constant byte address 0x4 - core index']
  #allocation1 [shape = 'u32[144,128]{1,0:T(1,128)}', space=vmem, size = 0x12000, scoped, tag = 'internal scratch']
  %s0 = inlined_call_operand.vmem [shape: f32[9,8,8], index: 0, kind: input, shape index: {}]
  %s1 = inlined_call_operand.vmem [shape: f32[8,8], index: 1, kind: input, shape index: {}]
  %s2 = inlined_call_operand.vmem [shape: f32[8,1], index: 2, kind: input, shape index: {}]
  %s3 = inlined_call_operand.vmem [shape: f32[8,1], index: 3, kind: input, shape index: {}]
  %s4 = inlined_call_operand.vmem [shape: f32[1,384], index: 4, kind: input, shape index: {}]
  %s5 = inlined_call_operand.vmem [shape: f32[2,8,512], index: 5, kind: input, shape index: {}]
  %s6 = inlined_call_operand.hbm [shape: f32[2,8,384], index: 6, kind: output, shape index: {}]
  %s7 = sld [smem:[#allocation0]]
  $region57: #{tpu_custom_call.1} parent=0
    _
  %s9 = ssub.s32 1, %s7
  %s10 = scalar_select 0, %s9, %s7
  $region1: #{tpu_custom_call.1} parent=0
    #allocation2 [shape = 'u8[24576]{0}', space=vmem, size = 0x6000, scoped, tag = 'output window, operand 0']
    #allocation3 [shape = 's32[2]{0}', space=sflag, size = 0x8, scoped, tag = 'scoped memory for tpu_custom_call.1']
    %11 = vsyncpa [#allocation3], 0
    %s12 = scalar_lea.sflag [#allocation3], 1
    %13 = vsyncpa %s12, 0
    loop: start=0, step=1, limit=4
    $region2: #{tpu_custom_call.1} parent=1 // loop_pre_header
      _
    $region3: #{tpu_custom_call.1} parent=1 // loop_header
      %s15 = sphi 0, %s19
      %p16 = scmp.ge.s32.totalorder %s15, 4
      %s23 = sphi 0, %s23
      %s25 = sphi 0, %s23
      %s26 = sphi 0, %s25
      %s40 = sphi 0, %s26
      %s44 = sphi 0, %s44
      %s46 = sphi 0, %s44
      %s47 = sphi 0, %s46
      %s61 = sphi 0, %s47
      %s65 = sphi 0, %s65
      %s67 = sphi 0, %s65
      %s68 = sphi 0, %s67
      %s82 = sphi 0, %s68
      %s86 = sphi 0, %s86
      %s88 = sphi 0, %s86
      %s89 = sphi 0, %s88
      %s103 = sphi 0, %s89
      %s107 = sphi 0, %s107
      %s109 = sphi 0, %s107
      %s110 = sphi 0, %s109
      %s124 = sphi 0, %s110
      %s130 = sphi 0, %s132
      %s133 = sphi 0, %s130
      %s134 = sphi 0, %s133
      %s150 = sphi 0, %s134
      %s156 = sphi 0, %s158
      %s159 = sphi 0, %s156
      %s160 = sphi 0, %s159
      %s176 = sphi 0, %s160
    $region4: #{tpu_custom_call.1} parent=1 // loop_header_branch
      %18 = sbr.rel (%p16) target = $region8
    $region5: #{tpu_custom_call.1} parent=1 // loop_body
      %s20 = ssub.s32 %s15, 1
      %s21 = ssub.s32 %s15, 2
      %s22 = sadd.s32 %s15, 1
      %s24 = sadd.s32 %s23, 1
      %p27 = scmp.eq.s32.totalorder %s15, 1
      %p28 = scmp.ne.s32.totalorder %s23, %s25
      %p29 = scmp.eq.s32.totalorder %s15, 0
      %p30 = por %p28, %p29
      %p31 = scmp.ne.s32.totalorder %s23, %s25
      %p32 = scmp.eq.s32.totalorder %s20, 1
      %p33 = por %p31, %p32
      %p34 = scmp.ne.s32.totalorder %s25, %s26
      %p35 = scmp.eq.s32.totalorder %s20, 0
      %p36 = por %p34, %p35
      %p37 = scmp.ne.s32.totalorder %s25, %s26
      %p38 = scmp.eq.s32.totalorder %s21, 1
      %p39 = por %p37, %p38
      %p41 = scmp.ne.s32.totalorder %s26, %s40
      %p42 = scmp.eq.s32.totalorder %s21, 0
      %p43 = por %p41, %p42
      %s45 = sadd.s32 %s44, 1
      %p48 = scmp.eq.s32.totalorder %s15, 1
      %p49 = scmp.ne.s32.totalorder %s44, %s46
      %p50 = scmp.eq.s32.totalorder %s15, 0
      %p51 = por %p49, %p50
      %p52 = scmp.ne.s32.totalorder %s44, %s46
      %p53 = scmp.eq.s32.totalorder %s20, 1
      %p54 = por %p52, %p53
      %p55 = scmp.ne.s32.totalorder %s46, %s47
      %p56 = scmp.eq.s32.totalorder %s20, 0
      %p57 = por %p55, %p56
      %p58 = scmp.ne.s32.totalorder %s46, %s47
      %p59 = scmp.eq.s32.totalorder %s21, 1
      %p60 = por %p58, %p59
      %p62 = scmp.ne.s32.totalorder %s47, %s61
      %p63 = scmp.eq.s32.totalorder %s21, 0
      %p64 = por %p62, %p63
      %s66 = sadd.s32 %s65, 1
      %p69 = scmp.eq.s32.totalorder %s15, 1
      %p70 = scmp.ne.s32.totalorder %s65, %s67
      %p71 = scmp.eq.s32.totalorder %s15, 0
      %p72 = por %p70, %p71
      %p73 = scmp.ne.s32.totalorder %s65, %s67
      %p74 = scmp.eq.s32.totalorder %s20, 1
      %p75 = por %p73, %p74
      %p76 = scmp.ne.s32.totalorder %s67, %s68
      %p77 = scmp.eq.s32.totalorder %s20, 0
      %p78 = por %p76, %p77
      %p79 = scmp.ne.s32.totalorder %s67, %s68
      %p80 = scmp.eq.s32.totalorder %s21, 1
      %p81 = por %p79, %p80
      %p83 = scmp.ne.s32.totalorder %s68, %s82
      %p84 = scmp.eq.s32.totalorder %s21, 0
      %p85 = por %p83, %p84
      %s87 = sadd.s32 %s86, 1
      %p90 = scmp.eq.s32.totalorder %s15, 1
      %p91 = scmp.ne.s32.totalorder %s86, %s88
      %p92 = scmp.eq.s32.totalorder %s15, 0
      %p93 = por %p91, %p92
      %p94 = scmp.ne.s32.totalorder %s86, %s88
      %p95 = scmp.eq.s32.totalorder %s20, 1
      %p96 = por %p94, %p95
      %p97 = scmp.ne.s32.totalorder %s88, %s89
      %p98 = scmp.eq.s32.totalorder %s20, 0
      %p99 = por %p97, %p98
      %p100 = scmp.ne.s32.totalorder %s88, %s89
      %p101 = scmp.eq.s32.totalorder %s21, 1
      %p102 = por %p100, %p101
      %p104 = scmp.ne.s32.totalorder %s89, %s103
      %p105 = scmp.eq.s32.totalorder %s21, 0
      %p106 = por %p104, %p105
      %s108 = sadd.s32 %s107, 1
      %p111 = scmp.eq.s32.totalorder %s15, 1
      %p112 = scmp.ne.s32.totalorder %s107, %s109
      %p113 = scmp.eq.s32.totalorder %s15, 0
      %p114 = por %p112, %p113
      %p115 = scmp.ne.s32.totalorder %s107, %s109
      %p116 = scmp.eq.s32.totalorder %s20, 1
      %p117 = por %p115, %p116
      %p118 = scmp.ne.s32.totalorder %s109, %s110
      %p119 = scmp.eq.s32.totalorder %s20, 0
      %p120 = por %p118, %p119
      %p121 = scmp.ne.s32.totalorder %s109, %s110
      %p122 = scmp.eq.s32.totalorder %s21, 1
      %p123 = por %p121, %p122
      %p125 = scmp.ne.s32.totalorder %s110, %s124
      %p126 = scmp.eq.s32.totalorder %s21, 0
      %p127 = por %p125, %p126
      %s128 = ssub.s32 %s15, %s22
      %p129 = scmp.eq.s32.totalorder %s128, 0
      %s131 = sadd.s32 %s130, 1
      %s132 = scalar_select %p129, %s130, %s131
      %p135 = pneg %p129
      %p136 = scmp.eq.s32.totalorder %s15, 1
      %p137 = por %p135, %p136
      %p138 = scmp.ne.s32.totalorder %s130, %s133
      %p139 = scmp.eq.s32.totalorder %s15, 0
      %p140 = por %p138, %p139
      %p141 = scmp.ne.s32.totalorder %s130, %s133
      %p142 = scmp.eq.s32.totalorder %s20, 1
      %p143 = por %p141, %p142
      %p144 = scmp.ne.s32.totalorder %s133, %s134
      %p145 = scmp.eq.s32.totalorder %s20, 0
      %p146 = por %p144, %p145
      %p147 = scmp.ne.s32.totalorder %s133, %s134
      %p148 = scmp.eq.s32.totalorder %s21, 1
      %p149 = por %p147, %p148
      %p151 = scmp.ne.s32.totalorder %s134, %s150
      %p152 = scmp.eq.s32.totalorder %s21, 0
      %p153 = por %p151, %p152
      %s154 = ssub.s32 %s15, %s22
      %p155 = scmp.eq.s32.totalorder %s154, 0
      %s157 = sadd.s32 %s156, 1
      %s158 = scalar_select %p155, %s156, %s157
      %p161 = pneg %p155
      %p162 = scmp.eq.s32.totalorder %s15, 1
      %p163 = por %p161, %p162
      %p164 = scmp.ne.s32.totalorder %s156, %s159
      %p165 = scmp.eq.s32.totalorder %s15, 0
      %p166 = por %p164, %p165
      %p167 = scmp.ne.s32.totalorder %s156, %s159
      %p168 = scmp.eq.s32.totalorder %s20, 1
      %p169 = por %p167, %p168
      %p170 = scmp.ne.s32.totalorder %s159, %s160
      %p171 = scmp.eq.s32.totalorder %s20, 0
      %p172 = por %p170, %p171
      %p173 = scmp.ne.s32.totalorder %s159, %s160
      %p174 = scmp.eq.s32.totalorder %s21, 1
      %p175 = por %p173, %p174
      %p177 = scmp.ne.s32.totalorder %s160, %s176
      %p178 = scmp.eq.s32.totalorder %s21, 0
      %p179 = por %p177, %p178
      %p180 = scmp.le.s32.totalorder 1, %s15
      %p181 = scmp.lt.s32.totalorder %s15, 3
      %p182 = pnand %p180, %p181
      %p183 = pneg %p182
      // Predicated region
      $region9: #{tpu_custom_call.1} parent=5 // pred_check
        _
      $region10: #{tpu_custom_call.1} parent=5 // pred_check_branch
        %185 = sbr.rel (%p182) target = $region12
      $region11: #{tpu_custom_call.1} parent=5 // pred_region
        %s186 = ssub.s32 %s15, 1
        // Predicated region
        $region13: #{tpu_custom_call.1} parent=11 // pred_check
          %p187 = pneg %p36
        $region14: #{tpu_custom_call.1} parent=11 // pred_check_branch
          %189 = sbr.rel (%p187) target = $region16
        $region15: #{tpu_custom_call.1} parent=11 // pred_region
          _
        $region16: #{tpu_custom_call.1} parent=11 // pred_fallthru
          _
        // Predicated region
        $region17: #{tpu_custom_call.1} parent=11 // pred_check
          %p190 = pneg %p57
        $region18: #{tpu_custom_call.1} parent=11 // pred_check_branch
          %192 = sbr.rel (%p190) target = $region20
        $region19: #{tpu_custom_call.1} parent=11 // pred_region
          _
        $region20: #{tpu_custom_call.1} parent=11 // pred_fallthru
          _
        // Predicated region
        $region21: #{tpu_custom_call.1} parent=11 // pred_check
          %p193 = pneg %p78
        $region22: #{tpu_custom_call.1} parent=11 // pred_check_branch
          %195 = sbr.rel (%p193) target = $region24
        $region23: #{tpu_custom_call.1} parent=11 // pred_region
          _
        $region24: #{tpu_custom_call.1} parent=11 // pred_fallthru
          _
        // Predicated region
        $region25: #{tpu_custom_call.1} parent=11 // pred_check
          %p196 = pneg %p99
        $region26: #{tpu_custom_call.1} parent=11 // pred_check_branch
          %198 = sbr.rel (%p196) target = $region28
        $region27: #{tpu_custom_call.1} parent=11 // pred_region
          _
        $region28: #{tpu_custom_call.1} parent=11 // pred_fallthru
          _
        // Predicated region
        $region29: #{tpu_custom_call.1} parent=11 // pred_check
          %p199 = pneg %p120
        $region30: #{tpu_custom_call.1} parent=11 // pred_check_branch
          %201 = sbr.rel (%p199) target = $region32
        $region31: #{tpu_custom_call.1} parent=11 // pred_region
          _
        $region32: #{tpu_custom_call.1} parent=11 // pred_fallthru
          _
      $region12: #{tpu_custom_call.1} parent=5 // pred_fallthru
        _
      %p202 = scmp.lt.s32.totalorder %s15, 2
      // Predicated region
      $region33: #{tpu_custom_call.1} parent=5 // pred_check
        %p203 = pneg %p202
      $region34: #{tpu_custom_call.1} parent=5 // pred_check_branch
        %205 = sbr.rel (%p203) target = $region36
      $region35: #{tpu_custom_call.1} parent=5 // pred_region
        // Predicated region
        $region37: #{tpu_custom_call.1} parent=35 // pred_check
          %p206 = pneg %p140
        $region38: #{tpu_custom_call.1} parent=35 // pred_check_branch
          %208 = sbr.rel (%p206) target = $region40
        $region39: #{tpu_custom_call.1} parent=35 // pred_region
          %p209 = scmp.lt.s32.totalorder %s15, 1
          %s210 = scalar_select %p209, %s15, 1
          %s211 = smul.addr %s210, 4
          %s212 = smul.addr %s211, 8
          %s213 = scalar_lea.vmem %s5, %s212
        $region40: #{tpu_custom_call.1} parent=35 // pred_fallthru
          _
      $region36: #{tpu_custom_call.1} parent=5 // pred_fallthru
        _
      %p214 = scmp.le.s32.totalorder 1, %s15
      %p215 = scmp.lt.s32.totalorder %s15, 3
      %p216 = pnand %p214, %p215
      %p217 = pneg %p216
      // Predicated region
      $region41: #{tpu_custom_call.1} parent=5 // pred_check
        _
      $region42: #{tpu_custom_call.1} parent=5 // pred_check_branch
        %219 = sbr.rel (%p216) target = $region44
      $region43: #{tpu_custom_call.1} parent=5 // pred_region
        %s220 = ssub.s32 %s15, 1
        %p221 = pneg %p36
        %p222 = pneg %p33
        %p223 = pneg %p57
        %p224 = pneg %p54
        %p225 = pneg %p78
        %p226 = pneg %p75
        %p227 = pneg %p99
        %p228 = pneg %p96
        %p229 = pneg %p120
        %p230 = pneg %p117
        %p231 = scmp.lt.s32.totalorder %s20, 1
        %s232 = scalar_select %p231, %s20, 1
        %s233 = smul.addr %s232, 4
        %s234 = smul.addr %s233, 8
        %s235 = scalar_lea.vmem %s5, %s234
        %p236 = pneg %p146
        %p237 = pneg %p143
        %p238 = pneg %p172
        %p239 = pneg %p169
        %s240 = sand.u32 %s159, 1
        %s241 = scalar_lea.sflag [#allocation3], %s240
        %s242 = sand.u32 %s159, 1
        %s243 = smul.addr %s242, 24
        %s244 = scalar_lea.vmem [#allocation2], %s243
        %p245 = scmp.lt.s32.totalorder %s20, 1
        %s246 = scalar_select %p245, %s20, 1
        %s247 = smul.addr %s246, 4
        %s248 = smul.addr %s247, 8
        %s249 = scalar_lea.vmem %s5, %s248
        %v250 = vld [vmem:[%s249] sm:$0xff]
        %v251 = vld [vmem:[%s249 + $0x8] sm:$0xff]
        %v252 = vld [vmem:[%s249 + $0x10] sm:$0xff]
        %v253 = vld [vmem:[%s249 + $0x18] sm:$0xff]
        %v254 = vld [vmem:[%s0] sm:$0xff]
        %s255 = scalar_lea.vmem %s0, 8
        %v256 = vld [vmem:[%s255] sm:$0xff]
        %261 = vrot.lane.b32.xlu0 %v250, 127
        %v262 = vpop.permute.xlu0 %261
        %263 = vrot.lane.b32.xlu0 %v251, 127
        %v264 = vpop.permute.xlu0 %263
        %265 = vrot.lane.b32.xlu0 %v252, 127
        %v266 = vpop.permute.xlu0 %265
        %267 = vrot.lane.b32.xlu0 %v253, 127
        %v268 = vpop.permute.xlu0 %267
        %vm269 = vcmask 1039360
        %v270 = vsel %vm269, %v262, %v264
        %v271 = vsel %vm269, %v264, %v266
        %v272 = vsel %vm269, %v266, %v268
        %vm276 = vcmask 64512
        %v278 = vsel %vm276, %v256, 0
        %280 = vmatprep.subr.mxu0 %v271
        %281 = vmatpush1.msra.mxu0 %v270
        %282 = vmatprep.subr.mxu0 0.0
        %283 = vmatpush1.msra.mxu0 0.0
        %284 = vmatprep.subr.mxu0 0.0
        %285 = vmatpush1.msra.mxu0 0.0
        %286 = vmatprep.subr.mxu0 0.0
        %287 = vmatpush1.msra.mxu0 0.0
        %288 = vmatprep.subr.mxu0 0.0
        %289 = vmatpush1.msra.mxu0 0.0
        %290 = vmatprep.subr.mxu0 0.0
        %291 = vmatpush1.msra.mxu0 0.0
        %292 = vmatprep.subr.mxu0 0.0
        %293 = vmatpush1.msra.mxu0 0.0
        %294 = vmatprep.subr.mxu0 0.0
        %295 = vmatpush1.msra.mxu0 0.0
        %296 = vmatprep.subr.mxu0 0.0
        %297 = vmatpush1.msra.mxu0 0.0
        %298 = vmatprep.subr.mxu0 0.0
        %299 = vmatpush1.msra.mxu0 0.0
        %300 = vmatprep.subr.mxu0 0.0
        %301 = vmatpush1.msra.mxu0 0.0
        %302 = vmatprep.subr.mxu0 0.0
        %303 = vmatpush1.msra.mxu0 0.0
        %304 = vmatprep.subr.mxu0 0.0
        %305 = vmatpush1.msra.mxu0 0.0
        %306 = vmatprep.subr.mxu0 0.0
        %307 = vmatpush1.msra.mxu0 0.0
        %308 = vmatprep.subr.mxu0 0.0
        %309 = vmatpush1.msra.mxu0 0.0
        %310 = vmatprep.subr.mxu0 0.0
        %311 = vmatpush1.msra.mxu0 0.0
        %312 = vmatprep.subr.mxu0 0.0
        %313 = vmatpush1.msra.mxu0 0.0
        %314 = vmatprep.subr.mxu0 0.0
        %315 = vmatpush1.msra.mxu0 0.0
        %316 = vmatprep.subr.mxu0 0.0
        %317 = vmatpush1.msra.mxu0 0.0
        %318 = vmatprep.subr.mxu0 0.0
        %319 = vmatpush1.msra.mxu0 0.0
        %320 = vmatprep.subr.mxu0 0.0
        %321 = vmatpush1.msra.mxu0 0.0
        %322 = vmatprep.subr.mxu0 0.0
        %323 = vmatpush1.msra.mxu0 0.0
        %324 = vmatprep.subr.mxu0 0.0
        %325 = vmatpush1.msra.mxu0 0.0
        %326 = vmatprep.subr.mxu0 0.0
        %327 = vmatpush1.msra.mxu0 0.0
        %328 = vmatprep.subr.mxu0 0.0
        %329 = vmatpush1.msra.mxu0 0.0
        %330 = vmatprep.subr.mxu0 0.0
        %331 = vmatpush1.msra.mxu0 0.0
        %332 = vmatprep.subr.mxu0 0.0
        %333 = vmatpush1.msra.mxu0 0.0
        %334 = vmatprep.subr.mxu0 0.0
        %335 = vmatpush1.msra.mxu0 0.0
        %336 = vmatprep.subr.mxu0 0.0
        %337 = vmatpush1.msra.mxu0 0.0
        %338 = vmatprep.subr.mxu0 0.0
        %339 = vmatpush1.msra.mxu0 0.0
        %340 = vmatprep.subr.mxu0 0.0
        %341 = vmatpush1.msra.mxu0 0.0
        %342 = vmatprep.subr.mxu0 0.0
        %343 = vmatpush1.msra.mxu0 0.0
        %344 = vmatprep.mubr.f32.mxu0 0.0
        %345 = vmatmul.mubr.f32.gmra.mrb[0].mxu0 %v278
        %v346 = vpop.f32.mrb[0].mxu0
        %v347 = vadd.f32 0.0, %v346
        %v348 = vpop.f32.mrb[0].mxu0
        %v349 = vadd.f32 0.0, %v348
        %350 = vdwg.mxu0
        %351 = vmatprep.subr.mxu0 0.0
        %352 = vmatpush1.msra.mxu0 %v272
        %353 = vmatprep.subr.mxu0 0.0
        %354 = vmatpush1.msra.mxu0 0.0
        %355 = vmatprep.subr.mxu0 0.0
        %356 = vmatpush1.msra.mxu0 0.0
        %357 = vmatprep.subr.mxu0 0.0
        %358 = vmatpush1.msra.mxu0 0.0
        %359 = vmatprep.subr.mxu0 0.0
        %360 = vmatpush1.msra.mxu0 0.0
        %361 = vmatprep.subr.mxu0 0.0
        %362 = vmatpush1.msra.mxu0 0.0
        %363 = vmatprep.subr.mxu0 0.0
        %364 = vmatpush1.msra.mxu0 0.0
        %365 = vmatprep.subr.mxu0 0.0
        %366 = vmatpush1.msra.mxu0 0.0
        %367 = vmatprep.subr.mxu0 0.0
        %368 = vmatpush1.msra.mxu0 0.0
        %369 = vmatprep.subr.mxu0 0.0
        %370 = vmatpush1.msra.mxu0 0.0
        %371 = vmatprep.subr.mxu0 0.0
        %372 = vmatpush1.msra.mxu0 0.0
        %373 = vmatprep.subr.mxu0 0.0
        %374 = vmatpush1.msra.mxu0 0.0
        %375 = vmatprep.subr.mxu0 0.0
        %376 = vmatpush1.msra.mxu0 0.0
        %377 = vmatprep.subr.mxu0 0.0
        %378 = vmatpush1.msra.mxu0 0.0
        %379 = vmatprep.subr.mxu0 0.0
        %380 = vmatpush1.msra.mxu0 0.0
        %381 = vmatprep.subr.mxu0 0.0
        %382 = vmatpush1.msra.mxu0 0.0
        %383 = vmatprep.subr.mxu0 0.0
        %384 = vmatpush1.msra.mxu0 0.0
        %385 = vmatprep.subr.mxu0 0.0
        %386 = vmatpush1.msra.mxu0 0.0
        %387 = vmatprep.subr.mxu0 0.0
        %388 = vmatpush1.msra.mxu0 0.0
        %389 = vmatprep.subr.mxu0 0.0
        %390 = vmatpush1.msra.mxu0 0.0
        %391 = vmatprep.subr.mxu0 0.0
        %392 = vmatpush1.msra.mxu0 0.0
        %393 = vmatprep.subr.mxu0 0.0
        %394 = vmatpush1.msra.mxu0 0.0
        %395 = vmatprep.subr.mxu0 0.0
        %396 = vmatpush1.msra.mxu0 0.0
        %397 = vmatprep.subr.mxu0 0.0
        %398 = vmatpush1.msra.mxu0 0.0
        %399 = vmatprep.subr.mxu0 0.0
        %400 = vmatpush1.msra.mxu0 0.0
        %401 = vmatprep.subr.mxu0 0.0
        %402 = vmatpush1.msra.mxu0 0.0
        %403 = vmatprep.subr.mxu0 0.0
        %404 = vmatpush1.msra.mxu0 0.0
        %405 = vmatprep.subr.mxu0 0.0
        %406 = vmatpush1.msra.mxu0 0.0
        %407 = vmatprep.subr.mxu0 0.0
        %408 = vmatpush1.msra.mxu0 0.0
        %409 = vmatprep.subr.mxu0 0.0
        %410 = vmatpush1.msra.mxu0 0.0
        %411 = vmatprep.subr.mxu0 0.0
        %412 = vmatpush1.msra.mxu0 0.0
        %413 = vmatprep.subr.mxu0 0.0
        %414 = vmatpush1.msra.mxu0 0.0
        %415 = vmatprep.mubr.f32.mxu0 0.0
        %416 = vmatmul.mubr.f32.gmra.mrb[0].mxu0 %v278
        %v417 = vpop.f32.mrb[0].mxu0
        %v418 = vadd.f32 0.0, %v417
        %v419 = vpop.f32.mrb[0].mxu0
        %420 = vdwg.mxu0
        %v422 = vsel %vm276, %v254, 0
        %424 = vmatprep.subr.mxu0 %v251
        %425 = vmatpush1.msra.mxu0 %v250
        %426 = vmatprep.subr.mxu0 0.0
        %427 = vmatpush1.msra.mxu0 0.0
        %428 = vmatprep.subr.mxu0 0.0
        %429 = vmatpush1.msra.mxu0 0.0
        %430 = vmatprep.subr.mxu0 0.0
        %431 = vmatpush1.msra.mxu0 0.0
        %432 = vmatprep.subr.mxu0 0.0
        %433 = vmatpush1.msra.mxu0 0.0
        %434 = vmatprep.subr.mxu0 0.0
        %435 = vmatpush1.msra.mxu0 0.0
        %436 = vmatprep.subr.mxu0 0.0
        %437 = vmatpush1.msra.mxu0 0.0
        %438 = vmatprep.subr.mxu0 0.0
        %439 = vmatpush1.msra.mxu0 0.0
        %440 = vmatprep.subr.mxu0 0.0
        %441 = vmatpush1.msra.mxu0 0.0
        %442 = vmatprep.subr.mxu0 0.0
        %443 = vmatpush1.msra.mxu0 0.0
        %444 = vmatprep.subr.mxu0 0.0
        %445 = vmatpush1.msra.mxu0 0.0
        %446 = vmatprep.subr.mxu0 0.0
        %447 = vmatpush1.msra.mxu0 0.0
        %448 = vmatprep.subr.mxu0 0.0
        %449 = vmatpush1.msra.mxu0 0.0
        %450 = vmatprep.subr.mxu0 0.0
        %451 = vmatpush1.msra.mxu0 0.0
        %452 = vmatprep.subr.mxu0 0.0
        %453 = vmatpush1.msra.mxu0 0.0
        %454 = vmatprep.subr.mxu0 0.0
        %455 = vmatpush1.msra.mxu0 0.0
        %456 = vmatprep.subr.mxu0 0.0
        %457 = vmatpush1.msra.mxu0 0.0
        %458 = vmatprep.subr.mxu0 0.0
        %459 = vmatpush1.msra.mxu0 0.0
        %460 = vmatprep.subr.mxu0 0.0
        %461 = vmatpush1.msra.mxu0 0.0
        %462 = vmatprep.subr.mxu0 0.0
        %463 = vmatpush1.msra.mxu0 0.0
        %464 = vmatprep.subr.mxu0 0.0
        %465 = vmatpush1.msra.mxu0 0.0
        %466 = vmatprep.subr.mxu0 0.0
        %467 = vmatpush1.msra.mxu0 0.0
        %468 = vmatprep.subr.mxu0 0.0
        %469 = vmatpush1.msra.mxu0 0.0
        %470 = vmatprep.subr.mxu0 0.0
        %471 = vmatpush1.msra.mxu0 0.0
        %472 = vmatprep.subr.mxu0 0.0
        %473 = vmatpush1.msra.mxu0 0.0
        %474 = vmatprep.subr.mxu0 0.0
        %475 = vmatpush1.msra.mxu0 0.0
        %476 = vmatprep.subr.mxu0 0.0
        %477 = vmatpush1.msra.mxu0 0.0
        %478 = vmatprep.subr.mxu0 0.0
        %479 = vmatpush1.msra.mxu0 0.0
        %480 = vmatprep.subr.mxu0 0.0
        %481 = vmatpush1.msra.mxu0 0.0
        %482 = vmatprep.subr.mxu0 0.0
        %483 = vmatpush1.msra.mxu0 0.0
        %484 = vmatprep.subr.mxu0 0.0
        %485 = vmatpush1.msra.mxu0 0.0
        %486 = vmatprep.subr.mxu0 0.0
        %487 = vmatpush1.msra.mxu0 0.0
        %488 = vmatprep.mubr.f32.mxu0 0.0
        %489 = vmatmul.mubr.f32.gmra.mrb[0].mxu0 %v422
        %v490 = vpop.f32.mrb[0].mxu0
        %v491 = vadd.f32 %v347, %v490
        %v492 = vpop.f32.mrb[0].mxu0
        %v493 = vadd.f32 %v349, %v492
        %494 = vdwg.mxu0
        %495 = vmatprep.subr.mxu0 0.0
        %496 = vmatpush1.msra.mxu0 %v252
        %497 = vmatprep.subr.mxu0 0.0
        %498 = vmatpush1.msra.mxu0 0.0
        %499 = vmatprep.subr.mxu0 0.0
        %500 = vmatpush1.msra.mxu0 0.0
        %501 = vmatprep.subr.mxu0 0.0
        %502 = vmatpush1.msra.mxu0 0.0
        %503 = vmatprep.subr.mxu0 0.0
        %504 = vmatpush1.msra.mxu0 0.0
        %505 = vmatprep.subr.mxu0 0.0
        %506 = vmatpush1.msra.mxu0 0.0
        %507 = vmatprep.subr.mxu0 0.0
        %508 = vmatpush1.msra.mxu0 0.0
        %509 = vmatprep.subr.mxu0 0.0
        %510 = vmatpush1.msra.mxu0 0.0
        %511 = vmatprep.subr.mxu0 0.0
        %512 = vmatpush1.msra.mxu0 0.0
        %513 = vmatprep.subr.mxu0 0.0
        %514 = vmatpush1.msra.mxu0 0.0
        %515 = vmatprep.subr.mxu0 0.0
        %516 = vmatpush1.msra.mxu0 0.0
        %517 = vmatprep.subr.mxu0 0.0
        %518 = vmatpush1.msra.mxu0 0.0
        %519 = vmatprep.subr.mxu0 0.0
        %520 = vmatpush1.msra.mxu0 0.0
        %521 = vmatprep.subr.mxu0 0.0
        %522 = vmatpush1.msra.mxu0 0.0
        %523 = vmatprep.subr.mxu0 0.0
        %524 = vmatpush1.msra.mxu0 0.0
        %525 = vmatprep.subr.mxu0 0.0
        %526 = vmatpush1.msra.mxu0 0.0
        %527 = vmatprep.subr.mxu0 0.0
        %528 = vmatpush1.msra.mxu0 0.0
        %529 = vmatprep.subr.mxu0 0.0
        %530 = vmatpush1.msra.mxu0 0.0
        %531 = vmatprep.subr.mxu0 0.0
        %532 = vmatpush1.msra.mxu0 0.0
        %533 = vmatprep.subr.mxu0 0.0
        %534 = vmatpush1.msra.mxu0 0.0
        %535 = vmatprep.subr.mxu0 0.0
        %536 = vmatpush1.msra.mxu0 0.0
        %537 = vmatprep.subr.mxu0 0.0
        %538 = vmatpush1.msra.mxu0 0.0
        %539 = vmatprep.subr.mxu0 0.0
        %540 = vmatpush1.msra.mxu0 0.0
        %541 = vmatprep.subr.mxu0 0.0
        %542 = vmatpush1.msra.mxu0 0.0
        %543 = vmatprep.subr.mxu0 0.0
        %544 = vmatpush1.msra.mxu0 0.0
        %545 = vmatprep.subr.mxu0 0.0
        %546 = vmatpush1.msra.mxu0 0.0
        %547 = vmatprep.subr.mxu0 0.0
        %548 = vmatpush1.msra.mxu0 0.0
        %549 = vmatprep.subr.mxu0 0.0
        %550 = vmatpush1.msra.mxu0 0.0
        %551 = vmatprep.subr.mxu0 0.0
        %552 = vmatpush1.msra.mxu0 0.0
        %553 = vmatprep.subr.mxu0 0.0
        %554 = vmatpush1.msra.mxu0 0.0
        %555 = vmatprep.subr.mxu0 0.0
        %556 = vmatpush1.msra.mxu0 0.0
        %557 = vmatprep.subr.mxu0 0.0
        %558 = vmatpush1.msra.mxu0 0.0
        %559 = vmatprep.mubr.f32.mxu0 0.0
        %560 = vmatmul.mubr.f32.gmra.mrb[0].mxu0 %v422
        %v561 = vpop.f32.mrb[0].mxu0
        %v562 = vadd.f32 %v418, %v561
        %v563 = vpop.f32.mrb[0].mxu0
        %564 = vdwg.mxu0
        %s565 = scalar_lea.vmem %s0, 16
        %v566 = vld [vmem:[%s565] sm:$0xff]
        %567 = vrot.lane.b32.xlu0 %v250, 126
        %v568 = vpop.permute.xlu0 %567
        %569 = vrot.lane.b32.xlu0 %v251, 126
        %v570 = vpop.permute.xlu0 %569
        %571 = vrot.lane.b32.xlu0 %v252, 126
        %v572 = vpop.permute.xlu0 %571
        %573 = vrot.lane.b32.xlu0 %v253, 126
        %v574 = vpop.permute.xlu0 %573
        %vm575 = vcmask 1031168
        %v576 = vsel %vm575, %v568, %v570
        %v577 = vsel %vm575, %v570, %v572
        %v578 = vsel %vm575, %v572, %v574
        %v583 = vsel %vm276, %v566, 0
        %585 = vmatprep.subr.mxu0 %v577
        %586 = vmatpush1.msra.mxu0 %v576
        %587 = vmatprep.subr.mxu0 0.0
        %588 = vmatpush1.msra.mxu0 0.0
        %589 = vmatprep.subr.mxu0 0.0
        %590 = vmatpush1.msra.mxu0 0.0
        %591 = vmatprep.subr.mxu0 0.0
        %592 = vmatpush1.msra.mxu0 0.0
        %593 = vmatprep.subr.mxu0 0.0
        %594 = vmatpush1.msra.mxu0 0.0
        %595 = vmatprep.subr.mxu0 0.0
        %596 = vmatpush1.msra.mxu0 0.0
        %597 = vmatprep.subr.mxu0 0.0
        %598 = vmatpush1.msra.mxu0 0.0
        %599 = vmatprep.subr.mxu0 0.0
        %600 = vmatpush1.msra.mxu0 0.0
        %601 = vmatprep.subr.mxu0 0.0
        %602 = vmatpush1.msra.mxu0 0.0
        %603 = vmatprep.subr.mxu0 0.0
        %604 = vmatpush1.msra.mxu0 0.0
        %605 = vmatprep.subr.mxu0 0.0
        %606 = vmatpush1.msra.mxu0 0.0
        %607 = vmatprep.subr.mxu0 0.0
        %608 = vmatpush1.msra.mxu0 0.0
        %609 = vmatprep.subr.mxu0 0.0
        %610 = vmatpush1.msra.mxu0 0.0
        %611 = vmatprep.subr.mxu0 0.0
        %612 = vmatpush1.msra.mxu0 0.0
        %613 = vmatprep.subr.mxu0 0.0
        %614 = vmatpush1.msra.mxu0 0.0
        %615 = vmatprep.subr.mxu0 0.0
        %616 = vmatpush1.msra.mxu0 0.0
        %617 = vmatprep.subr.mxu0 0.0
        %618 = vmatpush1.msra.mxu0 0.0
        %619 = vmatprep.subr.mxu0 0.0
        %620 = vmatpush1.msra.mxu0 0.0
        %621 = vmatprep.subr.mxu0 0.0
        %622 = vmatpush1.msra.mxu0 0.0
        %623 = vmatprep.subr.mxu0 0.0
        %624 = vmatpush1.msra.mxu0 0.0
        %625 = vmatprep.subr.mxu0 0.0
        %626 = vmatpush1.msra.mxu0 0.0
        %627 = vmatprep.subr.mxu0 0.0
        %628 = vmatpush1.msra.mxu0 0.0
        %629 = vmatprep.subr.mxu0 0.0
        %630 = vmatpush1.msra.mxu0 0.0
        %631 = vmatprep.subr.mxu0 0.0
        %632 = vmatpush1.msra.mxu0 0.0
        %633 = vmatprep.subr.mxu0 0.0
        %634 = vmatpush1.msra.mxu0 0.0
        %635 = vmatprep.subr.mxu0 0.0
        %636 = vmatpush1.msra.mxu0 0.0
        %637 = vmatprep.subr.mxu0 0.0
        %638 = vmatpush1.msra.mxu0 0.0
        %639 = vmatprep.subr.mxu0 0.0
        %640 = vmatpush1.msra.mxu0 0.0
        %641 = vmatprep.subr.mxu0 0.0
        %642 = vmatpush1.msra.mxu0 0.0
        %643 = vmatprep.subr.mxu0 0.0
        %644 = vmatpush1.msra.mxu0 0.0
        %645 = vmatprep.subr.mxu0 0.0
        %646 = vmatpush1.msra.mxu0 0.0
        %647 = vmatprep.subr.mxu0 0.0
        %648 = vmatpush1.msra.mxu0 0.0
        %649 = vmatprep.mubr.f32.mxu0 0.0
        %650 = vmatmul.mubr.f32.gmra.mrb[0].mxu0 %v583
        %v651 = vpop.f32.mrb[0].mxu0
        %v652 = vadd.f32 0.0, %v651
        %v653 = vpop.f32.mrb[0].mxu0
        %v654 = vadd.f32 0.0, %v653
        %655 = vdwg.mxu0
        %656 = vmatprep.subr.mxu0 0.0
        %657 = vmatpush1.msra.mxu0 %v578
        %658 = vmatprep.subr.mxu0 0.0
        %659 = vmatpush1.msra.mxu0 0.0
        %660 = vmatprep.subr.mxu0 0.0
        %661 = vmatpush1.msra.mxu0 0.0
        %662 = vmatprep.subr.mxu0 0.0
        %663 = vmatpush1.msra.mxu0 0.0
        %664 = vmatprep.subr.mxu0 0.0
        %665 = vmatpush1.msra.mxu0 0.0
        %666 = vmatprep.subr.mxu0 0.0
        %667 = vmatpush1.msra.mxu0 0.0
        %668 = vmatprep.subr.mxu0 0.0
        %669 = vmatpush1.msra.mxu0 0.0
        %670 = vmatprep.subr.mxu0 0.0
        %671 = vmatpush1.msra.mxu0 0.0
        %672 = vmatprep.subr.mxu0 0.0
        %673 = vmatpush1.msra.mxu0 0.0
        %674 = vmatprep.subr.mxu0 0.0
        %675 = vmatpush1.msra.mxu0 0.0
        %676 = vmatprep.subr.mxu0 0.0
        %677 = vmatpush1.msra.mxu0 0.0
        %678 = vmatprep.subr.mxu0 0.0
        %679 = vmatpush1.msra.mxu0 0.0
        %680 = vmatprep.subr.mxu0 0.0
        %681 = vmatpush1.msra.mxu0 0.0
        %682 = vmatprep.subr.mxu0 0.0
        %683 = vmatpush1.msra.mxu0 0.0
        %684 = vmatprep.subr.mxu0 0.0
        %685 = vmatpush1.msra.mxu0 0.0
        %686 = vmatprep.subr.mxu0 0.0
        %687 = vmatpush1.msra.mxu0 0.0
        %688 = vmatprep.subr.mxu0 0.0
        %689 = vmatpush1.msra.mxu0 0.0
        %690 = vmatprep.subr.mxu0 0.0
        %691 = vmatpush1.msra.mxu0 0.0
        %692 = vmatprep.subr.mxu0 0.0
        %693 = vmatpush1.msra.mxu0 0.0
        %694 = vmatprep.subr.mxu0 0.0
        %695 = vmatpush1.msra.mxu0 0.0
        %696 = vmatprep.subr.mxu0 0.0
        %697 = vmatpush1.msra.mxu0 0.0
        %698 = vmatprep.subr.mxu0 0.0
        %699 = vmatpush1.msra.mxu0 0.0
        %700 = vmatprep.subr.mxu0 0.0
        %701 = vmatpush1.msra.mxu0 0.0
        %702 = vmatprep.subr.mxu0 0.0
        %703 = vmatpush1.msra.mxu0 0.0
        %704 = vmatprep.subr.mxu0 0.0
        %705 = vmatpush1.msra.mxu0 0.0
        %706 = vmatprep.subr.mxu0 0.0
        %707 = vmatpush1.msra.mxu0 0.0
        %708 = vmatprep.subr.mxu0 0.0
        %709 = vmatpush1.msra.mxu0 0.0
        %710 = vmatprep.subr.mxu0 0.0
        %711 = vmatpush1.msra.mxu0 0.0
        %712 = vmatprep.subr.mxu0 0.0
        %713 = vmatpush1.msra.mxu0 0.0
        %714 = vmatprep.subr.mxu0 0.0
        %715 = vmatpush1.msra.mxu0 0.0
        %716 = vmatprep.subr.mxu0 0.0
        %717 = vmatpush1.msra.mxu0 0.0
        %718 = vmatprep.subr.mxu0 0.0
        %719 = vmatpush1.msra.mxu0 0.0
        %720 = vmatprep.mubr.f32.mxu0 0.0
        %721 = vmatmul.mubr.f32.gmra.mrb[0].mxu0 %v583
        %v722 = vpop.f32.mrb[0].mxu0
        %v723 = vadd.f32 0.0, %v722
        %v724 = vpop.f32.mrb[0].mxu0
        %725 = vdwg.mxu0
        %v726 = vadd.f32 %v491, %v652
        %v727 = vadd.f32 %v493, %v654
        %v728 = vadd.f32 %v562, %v723
        %s729 = scalar_lea.vmem %s0, 24
        %v730 = vld [vmem:[%s729] sm:$0xff]
        %731 = vrot.lane.b32.xlu0 %v250, 110
        %v732 = vpop.permute.xlu0 %731
        %733 = vrot.lane.b32.xlu0 %v251, 110
        %v734 = vpop.permute.xlu0 %733
        %735 = vrot.lane.b32.xlu0 %v252, 110
        %v736 = vpop.permute.xlu0 %735
        %737 = vrot.lane.b32.xlu0 %v253, 110
        %v738 = vpop.permute.xlu0 %737
        %vm739 = vcmask 900096
        %v740 = vsel %vm739, %v732, %v734
        %v741 = vsel %vm739, %v734, %v736
        %v742 = vsel %vm739, %v736, %v738
        %v747 = vsel %vm276, %v730, 0
        %749 = vmatprep.subr.mxu0 %v741
        %750 = vmatpush1.msra.mxu0 %v740
        %751 = vmatprep.subr.mxu0 0.0
        %752 = vmatpush1.msra.mxu0 0.0
        %753 = vmatprep.subr.mxu0 0.0
        %754 = vmatpush1.msra.mxu0 0.0
        %755 = vmatprep.subr.mxu0 0.0
        %756 = vmatpush1.msra.mxu0 0.0
        %757 = vmatprep.subr.mxu0 0.0
        %758 = vmatpush1.msra.mxu0 0.0
        %759 = vmatprep.subr.mxu0 0.0
        %760 = vmatpush1.msra.mxu0 0.0
        %761 = vmatprep.subr.mxu0 0.0
        %762 = vmatpush1.msra.mxu0 0.0
        %763 = vmatprep.subr.mxu0 0.0
        %764 = vmatpush1.msra.mxu0 0.0
        %765 = vmatprep.subr.mxu0 0.0
        %766 = vmatpush1.msra.mxu0 0.0
        %767 = vmatprep.subr.mxu0 0.0
        %768 = vmatpush1.msra.mxu0 0.0
        %769 = vmatprep.subr.mxu0 0.0
        %770 = vmatpush1.msra.mxu0 0.0
        %771 = vmatprep.subr.mxu0 0.0
        %772 = vmatpush1.msra.mxu0 0.0
        %773 = vmatprep.subr.mxu0 0.0
        %774 = vmatpush1.msra.mxu0 0.0
        %775 = vmatprep.subr.mxu0 0.0
        %776 = vmatpush1.msra.mxu0 0.0
        %777 = vmatprep.subr.mxu0 0.0
        %778 = vmatpush1.msra.mxu0 0.0
        %779 = vmatprep.subr.mxu0 0.0
        %780 = vmatpush1.msra.mxu0 0.0
        %781 = vmatprep.subr.mxu0 0.0
        %782 = vmatpush1.msra.mxu0 0.0
        %783 = vmatprep.subr.mxu0 0.0
        %784 = vmatpush1.msra.mxu0 0.0
        %785 = vmatprep.subr.mxu0 0.0
        %786 = vmatpush1.msra.mxu0 0.0
        %787 = vmatprep.subr.mxu0 0.0
        %788 = vmatpush1.msra.mxu0 0.0
        %789 = vmatprep.subr.mxu0 0.0
        %790 = vmatpush1.msra.mxu0 0.0
        %791 = vmatprep.subr.mxu0 0.0
        %792 = vmatpush1.msra.mxu0 0.0
        %793 = vmatprep.subr.mxu0 0.0
        %794 = vmatpush1.msra.mxu0 0.0
        %795 = vmatprep.subr.mxu0 0.0
        %796 = vmatpush1.msra.mxu0 0.0
        %797 = vmatprep.subr.mxu0 0.0
        %798 = vmatpush1.msra.mxu0 0.0
        %799 = vmatprep.subr.mxu0 0.0
        %800 = vmatpush1.msra.mxu0 0.0
        %801 = vmatprep.subr.mxu0 0.0
        %802 = vmatpush1.msra.mxu0 0.0
        %803 = vmatprep.subr.mxu0 0.0
        %804 = vmatpush1.msra.mxu0 0.0
        %805 = vmatprep.subr.mxu0 0.0
        %806 = vmatpush1.msra.mxu0 0.0
        %807 = vmatprep.subr.mxu0 0.0
        %808 = vmatpush1.msra.mxu0 0.0
        %809 = vmatprep.subr.mxu0 0.0
        %810 = vmatpush1.msra.mxu0 0.0
        %811 = vmatprep.subr.mxu0 0.0
        %812 = vmatpush1.msra.mxu0 0.0
        %813 = vmatprep.mubr.f32.mxu0 0.0
        %814 = vmatmul.mubr.f32.gmra.mrb[0].mxu0 %v747
        %v815 = vpop.f32.mrb[0].mxu0
        %v816 = vadd.f32 0.0, %v815
        %v817 = vpop.f32.mrb[0].mxu0
        %v818 = vadd.f32 0.0, %v817
        %819 = vdwg.mxu0
        %820 = vmatprep.subr.mxu0 0.0
        %821 = vmatpush1.msra.mxu0 %v742
        %822 = vmatprep.subr.mxu0 0.0
        %823 = vmatpush1.msra.mxu0 0.0
        %824 = vmatprep.subr.mxu0 0.0
        %825 = vmatpush1.msra.mxu0 0.0
        %826 = vmatprep.subr.mxu0 0.0
        %827 = vmatpush1.msra.mxu0 0.0
        %828 = vmatprep.subr.mxu0 0.0
        %829 = vmatpush1.msra.mxu0 0.0
        %830 = vmatprep.subr.mxu0 0.0
        %831 = vmatpush1.msra.mxu0 0.0
        %832 = vmatprep.subr.mxu0 0.0
        %833 = vmatpush1.msra.mxu0 0.0
        %834 = vmatprep.subr.mxu0 0.0
        %835 = vmatpush1.msra.mxu0 0.0
        %836 = vmatprep.subr.mxu0 0.0
        %837 = vmatpush1.msra.mxu0 0.0
        %838 = vmatprep.subr.mxu0 0.0
        %839 = vmatpush1.msra.mxu0 0.0
        %840 = vmatprep.subr.mxu0 0.0
        %841 = vmatpush1.msra.mxu0 0.0
        %842 = vmatprep.subr.mxu0 0.0
        %843 = vmatpush1.msra.mxu0 0.0
        %844 = vmatprep.subr.mxu0 0.0
        %845 = vmatpush1.msra.mxu0 0.0
        %846 = vmatprep.subr.mxu0 0.0
        %847 = vmatpush1.msra.mxu0 0.0
        %848 = vmatprep.subr.mxu0 0.0
        %849 = vmatpush1.msra.mxu0 0.0
        %850 = vmatprep.subr.mxu0 0.0
        %851 = vmatpush1.msra.mxu0 0.0
        %852 = vmatprep.subr.mxu0 0.0
        %853 = vmatpush1.msra.mxu0 0.0
        %854 = vmatprep.subr.mxu0 0.0
        %855 = vmatpush1.msra.mxu0 0.0
        %856 = vmatprep.subr.mxu0 0.0
        %857 = vmatpush1.msra.mxu0 0.0
        %858 = vmatprep.subr.mxu0 0.0
        %859 = vmatpush1.msra.mxu0 0.0
        %860 = vmatprep.subr.mxu0 0.0
        %861 = vmatpush1.msra.mxu0 0.0
        %862 = vmatprep.subr.mxu0 0.0
        %863 = vmatpush1.msra.mxu0 0.0
        %864 = vmatprep.subr.mxu0 0.0
        %865 = vmatpush1.msra.mxu0 0.0
        %866 = vmatprep.subr.mxu0 0.0
        %867 = vmatpush1.msra.mxu0 0.0
        %868 = vmatprep.subr.mxu0 0.0
        %869 = vmatpush1.msra.mxu0 0.0
        %870 = vmatprep.subr.mxu0 0.0
        %871 = vmatpush1.msra.mxu0 0.0
        %872 = vmatprep.subr.mxu0 0.0
        %873 = vmatpush1.msra.mxu0 0.0
        %874 = vmatprep.subr.mxu0 0.0
        %875 = vmatpush1.msra.mxu0 0.0
        %876 = vmatprep.subr.mxu0 0.0
        %877 = vmatpush1.msra.mxu0 0.0
        %878 = vmatprep.subr.mxu0 0.0
        %879 = vmatpush1.msra.mxu0 0.0
        %880 = vmatprep.subr.mxu0 0.0
        %881 = vmatpush1.msra.mxu0 0.0
        %882 = vmatprep.subr.mxu0 0.0
        %883 = vmatpush1.msra.mxu0 0.0
        %884 = vmatprep.mubr.f32.mxu0 0.0
        %885 = vmatmul.mubr.f32.gmra.mrb[0].mxu0 %v747
        %v886 = vpop.f32.mrb[0].mxu0
        %v887 = vadd.f32 0.0, %v886
        %v888 = vpop.f32.mrb[0].mxu0
        %889 = vdwg.mxu0
        %v890 = vadd.f32 %v726, %v816
        %v891 = vadd.f32 %v727, %v818
        %v892 = vadd.f32 %v728, %v887
        %s893 = scalar_lea.vmem %s0, 32
        %v894 = vld [vmem:[%s893] sm:$0xff]
        %895 = vrot.lane.b32.xlu0 %v250, 109
        %v896 = vpop.permute.xlu0 %895
        %897 = vrot.lane.b32.xlu0 %v251, 109
        %v898 = vpop.permute.xlu0 %897
        %899 = vrot.lane.b32.xlu0 %v252, 109
        %v900 = vpop.permute.xlu0 %899
        %901 = vrot.lane.b32.xlu0 %v253, 109
        %v902 = vpop.permute.xlu0 %901
        %vm903 = vcmask 891904
        %v904 = vsel %vm903, %v896, %v898
        %v905 = vsel %vm903, %v898, %v900
        %v906 = vsel %vm903, %v900, %v902
        %v911 = vsel %vm276, %v894, 0
        %913 = vmatprep.subr.mxu0 %v905
        %914 = vmatpush1.msra.mxu0 %v904
        %915 = vmatprep.subr.mxu0 0.0
        %916 = vmatpush1.msra.mxu0 0.0
        %917 = vmatprep.subr.mxu0 0.0
        %918 = vmatpush1.msra.mxu0 0.0
        %919 = vmatprep.subr.mxu0 0.0
        %920 = vmatpush1.msra.mxu0 0.0
        %921 = vmatprep.subr.mxu0 0.0
        %922 = vmatpush1.msra.mxu0 0.0
        %923 = vmatprep.subr.mxu0 0.0
        %924 = vmatpush1.msra.mxu0 0.0
        %925 = vmatprep.subr.mxu0 0.0
        %926 = vmatpush1.msra.mxu0 0.0
        %927 = vmatprep.subr.mxu0 0.0
        %928 = vmatpush1.msra.mxu0 0.0
        %929 = vmatprep.subr.mxu0 0.0
        %930 = vmatpush1.msra.mxu0 0.0
        %931 = vmatprep.subr.mxu0 0.0
        %932 = vmatpush1.msra.mxu0 0.0
        %933 = vmatprep.subr.mxu0 0.0
        %934 = vmatpush1.msra.mxu0 0.0
        %935 = vmatprep.subr.mxu0 0.0
        %936 = vmatpush1.msra.mxu0 0.0
        %937 = vmatprep.subr.mxu0 0.0
        %938 = vmatpush1.msra.mxu0 0.0
        %939 = vmatprep.subr.mxu0 0.0
        %940 = vmatpush1.msra.mxu0 0.0
        %941 = vmatprep.subr.mxu0 0.0
        %942 = vmatpush1.msra.mxu0 0.0
        %943 = vmatprep.subr.mxu0 0.0
        %944 = vmatpush1.msra.mxu0 0.0
        %945 = vmatprep.subr.mxu0 0.0
        %946 = vmatpush1.msra.mxu0 0.0
        %947 = vmatprep.subr.mxu0 0.0
        %948 = vmatpush1.msra.mxu0 0.0
        %949 = vmatprep.subr.mxu0 0.0
        %950 = vmatpush1.msra.mxu0 0.0
        %951 = vmatprep.subr.mxu0 0.0
        %952 = vmatpush1.msra.mxu0 0.0
        %953 = vmatprep.subr.mxu0 0.0
        %954 = vmatpush1.msra.mxu0 0.0
        %955 = vmatprep.subr.mxu0 0.0
        %956 = vmatpush1.msra.mxu0 0.0
        %957 = vmatprep.subr.mxu0 0.0
        %958 = vmatpush1.msra.mxu0 0.0
        %959 = vmatprep.subr.mxu0 0.0
        %960 = vmatpush1.msra.mxu0 0.0
        %961 = vmatprep.subr.mxu0 0.0
        %962 = vmatpush1.msra.mxu0 0.0
        %963 = vmatprep.subr.mxu0 0.0
        %964 = vmatpush1.msra.mxu0 0.0
        %965 = vmatprep.subr.mxu0 0.0
        %966 = vmatpush1.msra.mxu0 0.0
        %967 = vmatprep.subr.mxu0 0.0
        %968 = vmatpush1.msra.mxu0 0.0
        %969 = vmatprep.subr.mxu0 0.0
        %970 = vmatpush1.msra.mxu0 0.0
        %971 = vmatprep.subr.mxu0 0.0
        %972 = vmatpush1.msra.mxu0 0.0
        %973 = vmatprep.subr.mxu0 0.0
        %974 = vmatpush1.msra.mxu0 0.0
        %975 = vmatprep.subr.mxu0 0.0
        %976 = vmatpush1.msra.mxu0 0.0
        %977 = vmatprep.mubr.f32.mxu0 0.0
        %978 = vmatmul.mubr.f32.gmra.mrb[0].mxu0 %v911
        %v979 = vpop.f32.mrb[0].mxu0
        %v980 = vadd.f32 0.0, %v979
        %v981 = vpop.f32.mrb[0].mxu0
        %v982 = vadd.f32 0.0, %v981
        %983 = vdwg.mxu0
        %984 = vmatprep.subr.mxu0 0.0
        %985 = vmatpush1.msra.mxu0 %v906
        %986 = vmatprep.subr.mxu0 0.0
        %987 = vmatpush1.msra.mxu0 0.0
        %988 = vmatprep.subr.mxu0 0.0
        %989 = vmatpush1.msra.mxu0 0.0
        %990 = vmatprep.subr.mxu0 0.0
        %991 = vmatpush1.msra.mxu0 0.0
        %992 = vmatprep.subr.mxu0 0.0
        %993 = vmatpush1.msra.mxu0 0.0
        %994 = vmatprep.subr.mxu0 0.0
        %995 = vmatpush1.msra.mxu0 0.0
        %996 = vmatprep.subr.mxu0 0.0
        %997 = vmatpush1.msra.mxu0 0.0
        %998 = vmatprep.subr.mxu0 0.0
        %999 = vmatpush1.msra.mxu0 0.0
        %1000 = vmatprep.subr.mxu0 0.0
        %1001 = vmatpush1.msra.mxu0 0.0
        %1002 = vmatprep.subr.mxu0 0.0
        %1003 = vmatpush1.msra.mxu0 0.0
        %1004 = vmatprep.subr.mxu0 0.0
        %1005 = vmatpush1.msra.mxu0 0.0
        %1006 = vmatprep.subr.mxu0 0.0
        %1007 = vmatpush1.msra.mxu0 0.0
        %1008 = vmatprep.subr.mxu0 0.0
        %1009 = vmatpush1.msra.mxu0 0.0
        %1010 = vmatprep.subr.mxu0 0.0
        %1011 = vmatpush1.msra.mxu0 0.0
        %1012 = vmatprep.subr.mxu0 0.0
        %1013 = vmatpush1.msra.mxu0 0.0
        %1014 = vmatprep.subr.mxu0 0.0
        %1015 = vmatpush1.msra.mxu0 0.0
        %1016 = vmatprep.subr.mxu0 0.0
        %1017 = vmatpush1.msra.mxu0 0.0
        %1018 = vmatprep.subr.mxu0 0.0
        %1019 = vmatpush1.msra.mxu0 0.0
        %1020 = vmatprep.subr.mxu0 0.0
        %1021 = vmatpush1.msra.mxu0 0.0
        %1022 = vmatprep.subr.mxu0 0.0
        %1023 = vmatpush1.msra.mxu0 0.0
        %1024 = vmatprep.subr.mxu0 0.0
        %1025 = vmatpush1.msra.mxu0 0.0
        %1026 = vmatprep.subr.mxu0 0.0
        %1027 = vmatpush1.msra.mxu0 0.0
        %1028 = vmatprep.subr.mxu0 0.0
        %1029 = vmatpush1.msra.mxu0 0.0
        %1030 = vmatprep.subr.mxu0 0.0
        %1031 = vmatpush1.msra.mxu0 0.0
        %1032 = vmatprep.subr.mxu0 0.0
        %1033 = vmatpush1.msra.mxu0 0.0
        %1034 = vmatprep.subr.mxu0 0.0
        %1035 = vmatpush1.msra.mxu0 0.0
        %1036 = vmatprep.subr.mxu0 0.0
        %1037 = vmatpush1.msra.mxu0 0.0
        %1038 = vmatprep.subr.mxu0 0.0
        %1039 = vmatpush1.msra.mxu0 0.0
        %1040 = vmatprep.subr.mxu0 0.0
        %1041 = vmatpush1.msra.mxu0 0.0
        %1042 = vmatprep.subr.mxu0 0.0
        %1043 = vmatpush1.msra.mxu0 0.0
        %1044 = vmatprep.subr.mxu0 0.0
        %1045 = vmatpush1.msra.mxu0 0.0
        %1046 = vmatprep.subr.mxu0 0.0
        %1047 = vmatpush1.msra.mxu0 0.0
        %1048 = vmatprep.mubr.f32.mxu0 0.0
        %1049 = vmatmul.mubr.f32.gmra.mrb[0].mxu0 %v911
        %v1050 = vpop.f32.mrb[0].mxu0
        %v1051 = vadd.f32 0.0, %v1050
        %v1052 = vpop.f32.mrb[0].mxu0
        %1053 = vdwg.mxu0
        %v1054 = vadd.f32 %v890, %v980
        %v1055 = vadd.f32 %v891, %v982
        %v1056 = vadd.f32 %v892, %v1051
        %s1057 = scalar_lea.vmem %s0, 40
        %v1058 = vld [vmem:[%s1057] sm:$0xff]
        %1059 = vrot.lane.b32.xlu0 %v250, 108
        %v1060 = vpop.permute.xlu0 %1059
        %1061 = vrot.lane.b32.xlu0 %v251, 108
        %v1062 = vpop.permute.xlu0 %1061
        %1063 = vrot.lane.b32.xlu0 %v252, 108
        %v1064 = vpop.permute.xlu0 %1063
        %1065 = vrot.lane.b32.xlu0 %v253, 108
        %v1066 = vpop.permute.xlu0 %1065
        %vm1067 = vcmask 883712
        %v1068 = vsel %vm1067, %v1060, %v1062
        %v1069 = vsel %vm1067, %v1062, %v1064
        %v1070 = vsel %vm1067, %v1064, %v1066
        %v1075 = vsel %vm276, %v1058, 0
        %1077 = vmatprep.subr.mxu0 %v1069
        %1078 = vmatpush1.msra.mxu0 %v1068
        %1079 = vmatprep.subr.mxu0 0.0
        %1080 = vmatpush1.msra.mxu0 0.0
        %1081 = vmatprep.subr.mxu0 0.0
        %1082 = vmatpush1.msra.mxu0 0.0
        %1083 = vmatprep.subr.mxu0 0.0
        %1084 = vmatpush1.msra.mxu0 0.0
        %1085 = vmatprep.subr.mxu0 0.0
        %1086 = vmatpush1.msra.mxu0 0.0
        %1087 = vmatprep.subr.mxu0 0.0
        %1088 = vmatpush1.msra.mxu0 0.0
        %1089 = vmatprep.subr.mxu0 0.0
        %1090 = vmatpush1.msra.mxu0 0.0
        %1091 = vmatprep.subr.mxu0 0.0
        %1092 = vmatpush1.msra.mxu0 0.0
        %1093 = vmatprep.subr.mxu0 0.0
        %1094 = vmatpush1.msra.mxu0 0.0
        %1095 = vmatprep.subr.mxu0 0.0
        %1096 = vmatpush1.msra.mxu0 0.0
        %1097 = vmatprep.subr.mxu0 0.0
        %1098 = vmatpush1.msra.mxu0 0.0
        %1099 = vmatprep.subr.mxu0 0.0
        %1100 = vmatpush1.msra.mxu0 0.0
        %1101 = vmatprep.subr.mxu0 0.0
        %1102 = vmatpush1.msra.mxu0 0.0
        %1103 = vmatprep.subr.mxu0 0.0
        %1104 = vmatpush1.msra.mxu0 0.0
        %1105 = vmatprep.subr.mxu0 0.0
        %1106 = vmatpush1.msra.mxu0 0.0
        %1107 = vmatprep.subr.mxu0 0.0
        %1108 = vmatpush1.msra.mxu0 0.0
        %1109 = vmatprep.subr.mxu0 0.0
        %1110 = vmatpush1.msra.mxu0 0.0
        %1111 = vmatprep.subr.mxu0 0.0
        %1112 = vmatpush1.msra.mxu0 0.0
        %1113 = vmatprep.subr.mxu0 0.0
        %1114 = vmatpush1.msra.mxu0 0.0
        %1115 = vmatprep.subr.mxu0 0.0
        %1116 = vmatpush1.msra.mxu0 0.0
        %1117 = vmatprep.subr.mxu0 0.0
        %1118 = vmatpush1.msra.mxu0 0.0
        %1119 = vmatprep.subr.mxu0 0.0
        %1120 = vmatpush1.msra.mxu0 0.0
        %1121 = vmatprep.subr.mxu0 0.0
        %1122 = vmatpush1.msra.mxu0 0.0
        %1123 = vmatprep.subr.mxu0 0.0
        %1124 = vmatpush1.msra.mxu0 0.0
        %1125 = vmatprep.subr.mxu0 0.0
        %1126 = vmatpush1.msra.mxu0 0.0
        %1127 = vmatprep.subr.mxu0 0.0
        %1128 = vmatpush1.msra.mxu0 0.0
        %1129 = vmatprep.subr.mxu0 0.0
        %1130 = vmatpush1.msra.mxu0 0.0
        %1131 = vmatprep.subr.mxu0 0.0
        %1132 = vmatpush1.msra.mxu0 0.0
        %1133 = vmatprep.subr.mxu0 0.0
        %1134 = vmatpush1.msra.mxu0 0.0
        %1135 = vmatprep.subr.mxu0 0.0
        %1136 = vmatpush1.msra.mxu0 0.0
        %1137 = vmatprep.subr.mxu0 0.0
        %1138 = vmatpush1.msra.mxu0 0.0
        %1139 = vmatprep.subr.mxu0 0.0
        %1140 = vmatpush1.msra.mxu0 0.0
        %1141 = vmatprep.mubr.f32.mxu0 0.0
        %1142 = vmatmul.mubr.f32.gmra.mrb[0].mxu0 %v1075
        %v1143 = vpop.f32.mrb[0].mxu0
        %v1144 = vadd.f32 0.0, %v1143
        %v1145 = vpop.f32.mrb[0].mxu0
        %v1146 = vadd.f32 0.0, %v1145
        %1147 = vdwg.mxu0
        %1148 = vmatprep.subr.mxu0 0.0
        %1149 = vmatpush1.msra.mxu0 %v1070
        %1150 = vmatprep.subr.mxu0 0.0
        %1151 = vmatpush1.msra.mxu0 0.0
        %1152 = vmatprep.subr.mxu0 0.0
        %1153 = vmatpush1.msra.mxu0 0.0
        %1154 = vmatprep.subr.mxu0 0.0
        %1155 = vmatpush1.msra.mxu0 0.0
        %1156 = vmatprep.subr.mxu0 0.0
        %1157 = vmatpush1.msra.mxu0 0.0
        %1158 = vmatprep.subr.mxu0 0.0
        %1159 = vmatpush1.msra.mxu0 0.0
        %1160 = vmatprep.subr.mxu0 0.0
        %1161 = vmatpush1.msra.mxu0 0.0
        %1162 = vmatprep.subr.mxu0 0.0
        %1163 = vmatpush1.msra.mxu0 0.0
        %1164 = vmatprep.subr.mxu0 0.0
        %1165 = vmatpush1.msra.mxu0 0.0
        %1166 = vmatprep.subr.mxu0 0.0
        %1167 = vmatpush1.msra.mxu0 0.0
        %1168 = vmatprep.subr.mxu0 0.0
        %1169 = vmatpush1.msra.mxu0 0.0
        %1170 = vmatprep.subr.mxu0 0.0
        %1171 = vmatpush1.msra.mxu0 0.0
        %1172 = vmatprep.subr.mxu0 0.0
        %1173 = vmatpush1.msra.mxu0 0.0
        %1174 = vmatprep.subr.mxu0 0.0
        %1175 = vmatpush1.msra.mxu0 0.0
        %1176 = vmatprep.subr.mxu0 0.0
        %1177 = vmatpush1.msra.mxu0 0.0
        %1178 = vmatprep.subr.mxu0 0.0
        %1179 = vmatpush1.msra.mxu0 0.0
        %1180 = vmatprep.subr.mxu0 0.0
        %1181 = vmatpush1.msra.mxu0 0.0
        %1182 = vmatprep.subr.mxu0 0.0
        %1183 = vmatpush1.msra.mxu0 0.0
        %1184 = vmatprep.subr.mxu0 0.0
        %1185 = vmatpush1.msra.mxu0 0.0
        %1186 = vmatprep.subr.mxu0 0.0
        %1187 = vmatpush1.msra.mxu0 0.0
        %1188 = vmatprep.subr.mxu0 0.0
        %1189 = vmatpush1.msra.mxu0 0.0
        %1190 = vmatprep.subr.mxu0 0.0
        %1191 = vmatpush1.msra.mxu0 0.0
        %1192 = vmatprep.subr.mxu0 0.0
        %1193 = vmatpush1.msra.mxu0 0.0
        %1194 = vmatprep.subr.mxu0 0.0
        %1195 = vmatpush1.msra.mxu0 0.0
        %1196 = vmatprep.subr.mxu0 0.0
        %1197 = vmatpush1.msra.mxu0 0.0
        %1198 = vmatprep.subr.mxu0 0.0
        %1199 = vmatpush1.msra.mxu0 0.0
        %1200 = vmatprep.subr.mxu0 0.0
        %1201 = vmatpush1.msra.mxu0 0.0
        %1202 = vmatprep.subr.mxu0 0.0
        %1203 = vmatpush1.msra.mxu0 0.0
        %1204 = vmatprep.subr.mxu0 0.0
        %1205 = vmatpush1.msra.mxu0 0.0
        %1206 = vmatprep.subr.mxu0 0.0
        %1207 = vmatpush1.msra.mxu0 0.0
        %1208 = vmatprep.subr.mxu0 0.0
        %1209 = vmatpush1.msra.mxu0 0.0
        %1210 = vmatprep.subr.mxu0 0.0
        %1211 = vmatpush1.msra.mxu0 0.0
        %1212 = vmatprep.mubr.f32.mxu0 0.0
        %1213 = vmatmul.mubr.f32.gmra.mrb[0].mxu0 %v1075
        %v1214 = vpop.f32.mrb[0].mxu0
        %v1215 = vadd.f32 0.0, %v1214
        %v1216 = vpop.f32.mrb[0].mxu0
        %1217 = vdwg.mxu0
        %v1218 = vadd.f32 %v1054, %v1144
        %v1219 = vadd.f32 %v1055, %v1146
        %v1220 = vadd.f32 %v1056, %v1215
        %s1221 = scalar_lea.vmem %s0, 48
        %v1222 = vld [vmem:[%s1221] sm:$0xff]
        %1223 = vrot.lane.b32.xlu0 %v250, 92
        %v1224 = vpop.permute.xlu0 %1223
        %1225 = vrot.lane.b32.xlu0 %v251, 92
        %v1226 = vpop.permute.xlu0 %1225
        %1227 = vrot.lane.b32.xlu0 %v252, 92
        %v1228 = vpop.permute.xlu0 %1227
        %1229 = vrot.lane.b32.xlu0 %v253, 92
        %v1230 = vpop.permute.xlu0 %1229
        %vm1231 = vcmask 752640
        %v1232 = vsel %vm1231, %v1224, %v1226
        %v1233 = vsel %vm1231, %v1226, %v1228
        %v1234 = vsel %vm1231, %v1228, %v1230
        %v1239 = vsel %vm276, %v1222, 0
        %1241 = vmatprep.subr.mxu0 %v1233
        %1242 = vmatpush1.msra.mxu0 %v1232
        %1243 = vmatprep.subr.mxu0 0.0
        %1244 = vmatpush1.msra.mxu0 0.0
        %1245 = vmatprep.subr.mxu0 0.0
        %1246 = vmatpush1.msra.mxu0 0.0
        %1247 = vmatprep.subr.mxu0 0.0
        %1248 = vmatpush1.msra.mxu0 0.0
        %1249 = vmatprep.subr.mxu0 0.0
        %1250 = vmatpush1.msra.mxu0 0.0
        %1251 = vmatprep.subr.mxu0 0.0
        %1252 = vmatpush1.msra.mxu0 0.0
        %1253 = vmatprep.subr.mxu0 0.0
        %1254 = vmatpush1.msra.mxu0 0.0
        %1255 = vmatprep.subr.mxu0 0.0
        %1256 = vmatpush1.msra.mxu0 0.0
        %1257 = vmatprep.subr.mxu0 0.0
        %1258 = vmatpush1.msra.mxu0 0.0
        %1259 = vmatprep.subr.mxu0 0.0
        %1260 = vmatpush1.msra.mxu0 0.0
        %1261 = vmatprep.subr.mxu0 0.0
        %1262 = vmatpush1.msra.mxu0 0.0
        %1263 = vmatprep.subr.mxu0 0.0
        %1264 = vmatpush1.msra.mxu0 0.0
        %1265 = vmatprep.subr.mxu0 0.0
        %1266 = vmatpush1.msra.mxu0 0.0
        %1267 = vmatprep.subr.mxu0 0.0
        %1268 = vmatpush1.msra.mxu0 0.0
        %1269 = vmatprep.subr.mxu0 0.0
        %1270 = vmatpush1.msra.mxu0 0.0
        %1271 = vmatprep.subr.mxu0 0.0
        %1272 = vmatpush1.msra.mxu0 0.0
        %1273 = vmatprep.subr.mxu0 0.0
        %1274 = vmatpush1.msra.mxu0 0.0
        %1275 = vmatprep.subr.mxu0 0.0
        %1276 = vmatpush1.msra.mxu0 0.0
        %1277 = vmatprep.subr.mxu0 0.0
        %1278 = vmatpush1.msra.mxu0 0.0
        %1279 = vmatprep.subr.mxu0 0.0
        %1280 = vmatpush1.msra.mxu0 0.0
        %1281 = vmatprep.subr.mxu0 0.0
        %1282 = vmatpush1.msra.mxu0 0.0
        %1283 = vmatprep.subr.mxu0 0.0
        %1284 = vmatpush1.msra.mxu0 0.0
        %1285 = vmatprep.subr.mxu0 0.0
        %1286 = vmatpush1.msra.mxu0 0.0
        %1287 = vmatprep.subr.mxu0 0.0
        %1288 = vmatpush1.msra.mxu0 0.0
        %1289 = vmatprep.subr.mxu0 0.0
        %1290 = vmatpush1.msra.mxu0 0.0
        %1291 = vmatprep.subr.mxu0 0.0
        %1292 = vmatpush1.msra.mxu0 0.0
        %1293 = vmatprep.subr.mxu0 0.0
        %1294 = vmatpush1.msra.mxu0 0.0
        %1295 = vmatprep.subr.mxu0 0.0
        %1296 = vmatpush1.msra.mxu0 0.0
        %1297 = vmatprep.subr.mxu0 0.0
        %1298 = vmatpush1.msra.mxu0 0.0
        %1299 = vmatprep.subr.mxu0 0.0
        %1300 = vmatpush1.msra.mxu0 0.0
        %1301 = vmatprep.subr.mxu0 0.0
        %1302 = vmatpush1.msra.mxu0 0.0
        %1303 = vmatprep.subr.mxu0 0.0
        %1304 = vmatpush1.msra.mxu0 0.0
        %1305 = vmatprep.mubr.f32.mxu0 0.0
        %1306 = vmatmul.mubr.f32.gmra.mrb[0].mxu0 %v1239
        %v1307 = vpop.f32.mrb[0].mxu0
        %v1308 = vadd.f32 0.0, %v1307
        %v1309 = vpop.f32.mrb[0].mxu0
        %v1310 = vadd.f32 0.0, %v1309
        %1311 = vdwg.mxu0
        %1312 = vmatprep.subr.mxu0 0.0
        %1313 = vmatpush1.msra.mxu0 %v1234
        %1314 = vmatprep.subr.mxu0 0.0
        %1315 = vmatpush1.msra.mxu0 0.0
        %1316 = vmatprep.subr.mxu0 0.0
        %1317 = vmatpush1.msra.mxu0 0.0
        %1318 = vmatprep.subr.mxu0 0.0
        %1319 = vmatpush1.msra.mxu0 0.0
        %1320 = vmatprep.subr.mxu0 0.0
        %1321 = vmatpush1.msra.mxu0 0.0
        %1322 = vmatprep.subr.mxu0 0.0
        %1323 = vmatpush1.msra.mxu0 0.0
        %1324 = vmatprep.subr.mxu0 0.0
        %1325 = vmatpush1.msra.mxu0 0.0
        %1326 = vmatprep.subr.mxu0 0.0
        %1327 = vmatpush1.msra.mxu0 0.0
        %1328 = vmatprep.subr.mxu0 0.0
        %1329 = vmatpush1.msra.mxu0 0.0
        %1330 = vmatprep.subr.mxu0 0.0
        %1331 = vmatpush1.msra.mxu0 0.0
        %1332 = vmatprep.subr.mxu0 0.0
        %1333 = vmatpush1.msra.mxu0 0.0
        %1334 = vmatprep.subr.mxu0 0.0
        %1335 = vmatpush1.msra.mxu0 0.0
        %1336 = vmatprep.subr.mxu0 0.0
        %1337 = vmatpush1.msra.mxu0 0.0
        %1338 = vmatprep.subr.mxu0 0.0
        %1339 = vmatpush1.msra.mxu0 0.0
        %1340 = vmatprep.subr.mxu0 0.0
        %1341 = vmatpush1.msra.mxu0 0.0
        %1342 = vmatprep.subr.mxu0 0.0
        %1343 = vmatpush1.msra.mxu0 0.0
        %1344 = vmatprep.subr.mxu0 0.0
        %1345 = vmatpush1.msra.mxu0 0.0
        %1346 = vmatprep.subr.mxu0 0.0
        %1347 = vmatpush1.msra.mxu0 0.0
        %1348 = vmatprep.subr.mxu0 0.0
        %1349 = vmatpush1.msra.mxu0 0.0
        %1350 = vmatprep.subr.mxu0 0.0
        %1351 = vmatpush1.msra.mxu0 0.0
        %1352 = vmatprep.subr.mxu0 0.0
        %1353 = vmatpush1.msra.mxu0 0.0
        %1354 = vmatprep.subr.mxu0 0.0
        %1355 = vmatpush1.msra.mxu0 0.0
        %1356 = vmatprep.subr.mxu0 0.0
        %1357 = vmatpush1.msra.mxu0 0.0
        %1358 = vmatprep.subr.mxu0 0.0
        %1359 = vmatpush1.msra.mxu0 0.0
        %1360 = vmatprep.subr.mxu0 0.0
        %1361 = vmatpush1.msra.mxu0 0.0
        %1362 = vmatprep.subr.mxu0 0.0
        %1363 = vmatpush1.msra.mxu0 0.0
        %1364 = vmatprep.subr.mxu0 0.0
        %1365 = vmatpush1.msra.mxu0 0.0
        %1366 = vmatprep.subr.mxu0 0.0
        %1367 = vmatpush1.msra.mxu0 0.0
        %1368 = vmatprep.subr.mxu0 0.0
        %1369 = vmatpush1.msra.mxu0 0.0
        %1370 = vmatprep.subr.mxu0 0.0
        %1371 = vmatpush1.msra.mxu0 0.0
        %1372 = vmatprep.subr.mxu0 0.0
        %1373 = vmatpush1.msra.mxu0 0.0
        %1374 = vmatprep.subr.mxu0 0.0
        %1375 = vmatpush1.msra.mxu0 0.0
        %1376 = vmatprep.mubr.f32.mxu0 0.0
        %1377 = vmatmul.mubr.f32.gmra.mrb[0].mxu0 %v1239
        %v1378 = vpop.f32.mrb[0].mxu0
        %v1379 = vadd.f32 0.0, %v1378
        %v1380 = vpop.f32.mrb[0].mxu0
        %1381 = vdwg.mxu0
        %v1382 = vadd.f32 %v1218, %v1308
        %v1383 = vadd.f32 %v1219, %v1310
        %v1384 = vadd.f32 %v1220, %v1379
        %s1385 = scalar_lea.vmem %s0, 56
        %v1386 = vld [vmem:[%s1385] sm:$0xff]
        %1387 = vrot.lane.b32.xlu0 %v250, 91
        %v1388 = vpop.permute.xlu0 %1387
        %1389 = vrot.lane.b32.xlu0 %v251, 91
        %v1390 = vpop.permute.xlu0 %1389
        %1391 = vrot.lane.b32.xlu0 %v252, 91
        %v1392 = vpop.permute.xlu0 %1391
        %1393 = vrot.lane.b32.xlu0 %v253, 91
        %v1394 = vpop.permute.xlu0 %1393
        %vm1395 = vcmask 744448
        %v1396 = vsel %vm1395, %v1388, %v1390
        %v1397 = vsel %vm1395, %v1390, %v1392
        %v1398 = vsel %vm1395, %v1392, %v1394
        %v1403 = vsel %vm276, %v1386, 0
        %1405 = vmatprep.subr.mxu0 %v1397
        %1406 = vmatpush1.msra.mxu0 %v1396
        %1407 = vmatprep.subr.mxu0 0.0
        %1408 = vmatpush1.msra.mxu0 0.0
        %1409 = vmatprep.subr.mxu0 0.0
        %1410 = vmatpush1.msra.mxu0 0.0
        %1411 = vmatprep.subr.mxu0 0.0
        %1412 = vmatpush1.msra.mxu0 0.0
        %1413 = vmatprep.subr.mxu0 0.0
        %1414 = vmatpush1.msra.mxu0 0.0
        %1415 = vmatprep.subr.mxu0 0.0
        %1416 = vmatpush1.msra.mxu0 0.0
        %1417 = vmatprep.subr.mxu0 0.0
        %1418 = vmatpush1.msra.mxu0 0.0
        %1419 = vmatprep.subr.mxu0 0.0
        %1420 = vmatpush1.msra.mxu0 0.0
        %1421 = vmatprep.subr.mxu0 0.0
        %1422 = vmatpush1.msra.mxu0 0.0
        %1423 = vmatprep.subr.mxu0 0.0
        %1424 = vmatpush1.msra.mxu0 0.0
        %1425 = vmatprep.subr.mxu0 0.0
        %1426 = vmatpush1.msra.mxu0 0.0
        %1427 = vmatprep.subr.mxu0 0.0
        %1428 = vmatpush1.msra.mxu0 0.0
        %1429 = vmatprep.subr.mxu0 0.0
        %1430 = vmatpush1.msra.mxu0 0.0
        %1431 = vmatprep.subr.mxu0 0.0
        %1432 = vmatpush1.msra.mxu0 0.0
        %1433 = vmatprep.subr.mxu0 0.0
        %1434 = vmatpush1.msra.mxu0 0.0
        %1435 = vmatprep.subr.mxu0 0.0
        %1436 = vmatpush1.msra.mxu0 0.0
        %1437 = vmatprep.subr.mxu0 0.0
        %1438 = vmatpush1.msra.mxu0 0.0
        %1439 = vmatprep.subr.mxu0 0.0
        %1440 = vmatpush1.msra.mxu0 0.0
        %1441 = vmatprep.subr.mxu0 0.0
        %1442 = vmatpush1.msra.mxu0 0.0
        %1443 = vmatprep.subr.mxu0 0.0
        %1444 = vmatpush1.msra.mxu0 0.0
        %1445 = vmatprep.subr.mxu0 0.0
        %1446 = vmatpush1.msra.mxu0 0.0
        %1447 = vmatprep.subr.mxu0 0.0
        %1448 = vmatpush1.msra.mxu0 0.0
        %1449 = vmatprep.subr.mxu0 0.0
        %1450 = vmatpush1.msra.mxu0 0.0
        %1451 = vmatprep.subr.mxu0 0.0
        %1452 = vmatpush1.msra.mxu0 0.0
        %1453 = vmatprep.subr.mxu0 0.0
        %1454 = vmatpush1.msra.mxu0 0.0
        %1455 = vmatprep.subr.mxu0 0.0
        %1456 = vmatpush1.msra.mxu0 0.0
        %1457 = vmatprep.subr.mxu0 0.0
        %1458 = vmatpush1.msra.mxu0 0.0
        %1459 = vmatprep.subr.mxu0 0.0
        %1460 = vmatpush1.msra.mxu0 0.0
        %1461 = vmatprep.subr.mxu0 0.0
        %1462 = vmatpush1.msra.mxu0 0.0
        %1463 = vmatprep.subr.mxu0 0.0
        %1464 = vmatpush1.msra.mxu0 0.0
        %1465 = vmatprep.subr.mxu0 0.0
        %1466 = vmatpush1.msra.mxu0 0.0
        %1467 = vmatprep.subr.mxu0 0.0
        %1468 = vmatpush1.msra.mxu0 0.0
        %1469 = vmatprep.mubr.f32.mxu0 0.0
        %1470 = vmatmul.mubr.f32.gmra.mrb[0].mxu0 %v1403
        %v1471 = vpop.f32.mrb[0].mxu0
        %v1472 = vadd.f32 0.0, %v1471
        %v1473 = vpop.f32.mrb[0].mxu0
        %v1474 = vadd.f32 0.0, %v1473
        %1475 = vdwg.mxu0
        %1476 = vmatprep.subr.mxu0 0.0
        %1477 = vmatpush1.msra.mxu0 %v1398
        %1478 = vmatprep.subr.mxu0 0.0
        %1479 = vmatpush1.msra.mxu0 0.0
        %1480 = vmatprep.subr.mxu0 0.0
        %1481 = vmatpush1.msra.mxu0 0.0
        %1482 = vmatprep.subr.mxu0 0.0
        %1483 = vmatpush1.msra.mxu0 0.0
        %1484 = vmatprep.subr.mxu0 0.0
        %1485 = vmatpush1.msra.mxu0 0.0
        %1486 = vmatprep.subr.mxu0 0.0
        %1487 = vmatpush1.msra.mxu0 0.0
        %1488 = vmatprep.subr.mxu0 0.0
        %1489 = vmatpush1.msra.mxu0 0.0
        %1490 = vmatprep.subr.mxu0 0.0
        %1491 = vmatpush1.msra.mxu0 0.0
        %1492 = vmatprep.subr.mxu0 0.0
        %1493 = vmatpush1.msra.mxu0 0.0
        %1494 = vmatprep.subr.mxu0 0.0
        %1495 = vmatpush1.msra.mxu0 0.0
        %1496 = vmatprep.subr.mxu0 0.0
        %1497 = vmatpush1.msra.mxu0 0.0
        %1498 = vmatprep.subr.mxu0 0.0
        %1499 = vmatpush1.msra.mxu0 0.0
        %1500 = vmatprep.subr.mxu0 0.0
        %1501 = vmatpush1.msra.mxu0 0.0
        %1502 = vmatprep.subr.mxu0 0.0
        %1503 = vmatpush1.msra.mxu0 0.0
        %1504 = vmatprep.subr.mxu0 0.0
        %1505 = vmatpush1.msra.mxu0 0.0
        %1506 = vmatprep.subr.mxu0 0.0
        %1507 = vmatpush1.msra.mxu0 0.0
        %1508 = vmatprep.subr.mxu0 0.0
        %1509 = vmatpush1.msra.mxu0 0.0
        %1510 = vmatprep.subr.mxu0 0.0
        %1511 = vmatpush1.msra.mxu0 0.0
        %1512 = vmatprep.subr.mxu0 0.0
        %1513 = vmatpush1.msra.mxu0 0.0
        %1514 = vmatprep.subr.mxu0 0.0
        %1515 = vmatpush1.msra.mxu0 0.0
        %1516 = vmatprep.subr.mxu0 0.0
        %1517 = vmatpush1.msra.mxu0 0.0
        %1518 = vmatprep.subr.mxu0 0.0
        %1519 = vmatpush1.msra.mxu0 0.0
        %1520 = vmatprep.subr.mxu0 0.0
        %1521 = vmatpush1.msra.mxu0 0.0
        %1522 = vmatprep.subr.mxu0 0.0
        %1523 = vmatpush1.msra.mxu0 0.0
        %1524 = vmatprep.subr.mxu0 0.0
        %1525 = vmatpush1.msra.mxu0 0.0
        %1526 = vmatprep.subr.mxu0 0.0
        %1527 = vmatpush1.msra.mxu0 0.0
        %1528 = vmatprep.subr.mxu0 0.0
        %1529 = vmatpush1.msra.mxu0 0.0
        %1530 = vmatprep.subr.mxu0 0.0
        %1531 = vmatpush1.msra.mxu0 0.0
        %1532 = vmatprep.subr.mxu0 0.0
        %1533 = vmatpush1.msra.mxu0 0.0
        %1534 = vmatprep.subr.mxu0 0.0
        %1535 = vmatpush1.msra.mxu0 0.0
        %1536 = vmatprep.subr.mxu0 0.0
        %1537 = vmatpush1.msra.mxu0 0.0
        %1538 = vmatprep.subr.mxu0 0.0
        %1539 = vmatpush1.msra.mxu0 0.0
        %1540 = vmatprep.mubr.f32.mxu0 0.0
        %1541 = vmatmul.mubr.f32.gmra.mrb[0].mxu0 %v1403
        %v1542 = vpop.f32.mrb[0].mxu0
        %v1543 = vadd.f32 0.0, %v1542
        %v1544 = vpop.f32.mrb[0].mxu0
        %1545 = vdwg.mxu0
        %v1546 = vadd.f32 %v1382, %v1472
        %v1547 = vadd.f32 %v1383, %v1474
        %v1548 = vadd.f32 %v1384, %v1543
        %s1549 = scalar_lea.vmem %s0, 64
        %v1550 = vld [vmem:[%s1549] sm:$0xff]
        %1551 = vrot.lane.b32.xlu0 %v250, 90
        %v1552 = vpop.permute.xlu0 %1551
        %1553 = vrot.lane.b32.xlu0 %v251, 90
        %v1554 = vpop.permute.xlu0 %1553
        %1555 = vrot.lane.b32.xlu0 %v252, 90
        %v1556 = vpop.permute.xlu0 %1555
        %1557 = vrot.lane.b32.xlu0 %v253, 90
        %v1558 = vpop.permute.xlu0 %1557
        %vm1559 = vcmask 736256
        %v1560 = vsel %vm1559, %v1552, %v1554
        %v1561 = vsel %vm1559, %v1554, %v1556
        %v1562 = vsel %vm1559, %v1556, %v1558
        %v1567 = vsel %vm276, %v1550, 0
        %1569 = vmatprep.subr.mxu0 %v1561
        %1570 = vmatpush1.msra.mxu0 %v1560
        %1571 = vmatprep.subr.mxu0 0.0
        %1572 = vmatpush1.msra.mxu0 0.0
        %1573 = vmatprep.subr.mxu0 0.0
        %1574 = vmatpush1.msra.mxu0 0.0
        %1575 = vmatprep.subr.mxu0 0.0
        %1576 = vmatpush1.msra.mxu0 0.0
        %1577 = vmatprep.subr.mxu0 0.0
        %1578 = vmatpush1.msra.mxu0 0.0
        %1579 = vmatprep.subr.mxu0 0.0
        %1580 = vmatpush1.msra.mxu0 0.0
        %1581 = vmatprep.subr.mxu0 0.0
        %1582 = vmatpush1.msra.mxu0 0.0
        %1583 = vmatprep.subr.mxu0 0.0
        %1584 = vmatpush1.msra.mxu0 0.0
        %1585 = vmatprep.subr.mxu0 0.0
        %1586 = vmatpush1.msra.mxu0 0.0
        %1587 = vmatprep.subr.mxu0 0.0
        %1588 = vmatpush1.msra.mxu0 0.0
        %1589 = vmatprep.subr.mxu0 0.0
        %1590 = vmatpush1.msra.mxu0 0.0
        %1591 = vmatprep.subr.mxu0 0.0
        %1592 = vmatpush1.msra.mxu0 0.0
        %1593 = vmatprep.subr.mxu0 0.0
        %1594 = vmatpush1.msra.mxu0 0.0
        %1595 = vmatprep.subr.mxu0 0.0
        %1596 = vmatpush1.msra.mxu0 0.0
        %1597 = vmatprep.subr.mxu0 0.0
        %1598 = vmatpush1.msra.mxu0 0.0
        %1599 = vmatprep.subr.mxu0 0.0
        %1600 = vmatpush1.msra.mxu0 0.0
        %1601 = vmatprep.subr.mxu0 0.0
        %1602 = vmatpush1.msra.mxu0 0.0
        %1603 = vmatprep.subr.mxu0 0.0
        %1604 = vmatpush1.msra.mxu0 0.0
        %1605 = vmatprep.subr.mxu0 0.0
        %1606 = vmatpush1.msra.mxu0 0.0
        %1607 = vmatprep.subr.mxu0 0.0
        %1608 = vmatpush1.msra.mxu0 0.0
        %1609 = vmatprep.subr.mxu0 0.0
        %1610 = vmatpush1.msra.mxu0 0.0
        %1611 = vmatprep.subr.mxu0 0.0
        %1612 = vmatpush1.msra.mxu0 0.0
        %1613 = vmatprep.subr.mxu0 0.0
        %1614 = vmatpush1.msra.mxu0 0.0
        %1615 = vmatprep.subr.mxu0 0.0
        %1616 = vmatpush1.msra.mxu0 0.0
        %1617 = vmatprep.subr.mxu0 0.0
        %1618 = vmatpush1.msra.mxu0 0.0
        %1619 = vmatprep.subr.mxu0 0.0
        %1620 = vmatpush1.msra.mxu0 0.0
        %1621 = vmatprep.subr.mxu0 0.0
        %1622 = vmatpush1.msra.mxu0 0.0
        %1623 = vmatprep.subr.mxu0 0.0
        %1624 = vmatpush1.msra.mxu0 0.0
        %1625 = vmatprep.subr.mxu0 0.0
        %1626 = vmatpush1.msra.mxu0 0.0
        %1627 = vmatprep.subr.mxu0 0.0
        %1628 = vmatpush1.msra.mxu0 0.0
        %1629 = vmatprep.subr.mxu0 0.0
        %1630 = vmatpush1.msra.mxu0 0.0
        %1631 = vmatprep.subr.mxu0 0.0
        %1632 = vmatpush1.msra.mxu0 0.0
        %1633 = vmatprep.mubr.f32.mxu0 0.0
        %1634 = vmatmul.mubr.f32.gmra.mrb[0].mxu0 %v1567
        %v1635 = vpop.f32.mrb[0].mxu0
        %v1636 = vadd.f32 0.0, %v1635
        %v1637 = vpop.f32.mrb[0].mxu0
        %v1638 = vadd.f32 0.0, %v1637
        %1639 = vdwg.mxu0
        %1640 = vmatprep.subr.mxu0 0.0
        %1641 = vmatpush1.msra.mxu0 %v1562
        %1642 = vmatprep.subr.mxu0 0.0
        %1643 = vmatpush1.msra.mxu0 0.0
        %1644 = vmatprep.subr.mxu0 0.0
        %1645 = vmatpush1.msra.mxu0 0.0
        %1646 = vmatprep.subr.mxu0 0.0
        %1647 = vmatpush1.msra.mxu0 0.0
        %1648 = vmatprep.subr.mxu0 0.0
        %1649 = vmatpush1.msra.mxu0 0.0
        %1650 = vmatprep.subr.mxu0 0.0
        %1651 = vmatpush1.msra.mxu0 0.0
        %1652 = vmatprep.subr.mxu0 0.0
        %1653 = vmatpush1.msra.mxu0 0.0
        %1654 = vmatprep.subr.mxu0 0.0
        %1655 = vmatpush1.msra.mxu0 0.0
        %1656 = vmatprep.subr.mxu0 0.0
        %1657 = vmatpush1.msra.mxu0 0.0
        %1658 = vmatprep.subr.mxu0 0.0
        %1659 = vmatpush1.msra.mxu0 0.0
        %1660 = vmatprep.subr.mxu0 0.0
        %1661 = vmatpush1.msra.mxu0 0.0
        %1662 = vmatprep.subr.mxu0 0.0
        %1663 = vmatpush1.msra.mxu0 0.0
        %1664 = vmatprep.subr.mxu0 0.0
        %1665 = vmatpush1.msra.mxu0 0.0
        %1666 = vmatprep.subr.mxu0 0.0
        %1667 = vmatpush1.msra.mxu0 0.0
        %1668 = vmatprep.subr.mxu0 0.0
        %1669 = vmatpush1.msra.mxu0 0.0
        %1670 = vmatprep.subr.mxu0 0.0
        %1671 = vmatpush1.msra.mxu0 0.0
        %1672 = vmatprep.subr.mxu0 0.0
        %1673 = vmatpush1.msra.mxu0 0.0
        %1674 = vmatprep.subr.mxu0 0.0
        %1675 = vmatpush1.msra.mxu0 0.0
        %1676 = vmatprep.subr.mxu0 0.0
        %1677 = vmatpush1.msra.mxu0 0.0
        %1678 = vmatprep.subr.mxu0 0.0
        %1679 = vmatpush1.msra.mxu0 0.0
        %1680 = vmatprep.subr.mxu0 0.0
        %1681 = vmatpush1.msra.mxu0 0.0
        %1682 = vmatprep.subr.mxu0 0.0
        %1683 = vmatpush1.msra.mxu0 0.0
        %1684 = vmatprep.subr.mxu0 0.0
        %1685 = vmatpush1.msra.mxu0 0.0
        %1686 = vmatprep.subr.mxu0 0.0
        %1687 = vmatpush1.msra.mxu0 0.0
        %1688 = vmatprep.subr.mxu0 0.0
        %1689 = vmatpush1.msra.mxu0 0.0
        %1690 = vmatprep.subr.mxu0 0.0
        %1691 = vmatpush1.msra.mxu0 0.0
        %1692 = vmatprep.subr.mxu0 0.0
        %1693 = vmatpush1.msra.mxu0 0.0
        %1694 = vmatprep.subr.mxu0 0.0
        %1695 = vmatpush1.msra.mxu0 0.0
        %1696 = vmatprep.subr.mxu0 0.0
        %1697 = vmatpush1.msra.mxu0 0.0
        %1698 = vmatprep.subr.mxu0 0.0
        %1699 = vmatpush1.msra.mxu0 0.0
        %1700 = vmatprep.subr.mxu0 0.0
        %1701 = vmatpush1.msra.mxu0 0.0
        %1702 = vmatprep.subr.mxu0 0.0
        %1703 = vmatpush1.msra.mxu0 0.0
        %1704 = vmatprep.mubr.f32.mxu0 0.0
        %1705 = vmatmul.mubr.f32.gmra.mrb[0].mxu0 %v1567
        %v1706 = vpop.f32.mrb[0].mxu0
        %v1707 = vadd.f32 0.0, %v1706
        %v1708 = vpop.f32.mrb[0].mxu0
        %1709 = vdwg.mxu0
        %v1710 = vadd.f32 %v1546, %v1636
        %v1711 = vadd.f32 %v1547, %v1638
        %v1712 = vadd.f32 %v1548, %v1707
        %v1713 = vld [vmem:[%s4] sm:$0x7]
        %v1715 = vlaneseq
        %v1716 = vshrl.u32 %v1715, 7
        %v1717 = vsub.s32 0, %v1716
        %v1718 = vrot.slane %v1713, %v1717
        %v1719 = vlaneseq
        %v1720 = vshrl.u32 %v1719, 7
        %v1721 = vsub.s32 1, %v1720
        %v1722 = vrot.slane %v1713, %v1721
        %v1723 = vlaneseq
        %v1724 = vshrl.u32 %v1723, 7
        %v1725 = vsub.s32 2, %v1724
        %v1726 = vrot.slane %v1713, %v1725
        %v1730 = vmul.f32 %v1710, %v1718
        %v1731 = vmul.f32 %v1711, %v1722
        %v1732 = vmul.f32 %v1712, %v1726
        %v1733 = vadd.f32 %v1730, %v1731
        %v1734 = vadd.f32 %v1733, %v1732
        %1735 = vadd.xlane.f32.xlu0 %v1734
        %v1736 = vpop.xlane.xlu0 %1735
        %v1737 = vmul.f32 %v1730, %v1710
        %v1738 = vmul.f32 %v1731, %v1711
        %v1739 = vmul.f32 %v1732, %v1712
        %v1740 = vadd.f32 %v1737, %v1738
        %v1741 = vadd.f32 %v1740, %v1739
        %1742 = vadd.xlane.f32.xlu0 %v1741
        %v1743 = vpop.xlane.xlu0 %1742
        %v1744 = vld [vmem:[%s1] sm:$0xff]
        %v1746 = vsel %vm276, %v1744, 0
        %1748 = vmatprep.subr.mxu0 0.0
        %1749 = vmatpush1.msra.mxu0 %v1736
        %1750 = vmatprep.subr.mxu0 0.0
        %1751 = vmatpush1.msra.mxu0 0.0
        %1752 = vmatprep.subr.mxu0 0.0
        %1753 = vmatpush1.msra.mxu0 0.0
        %1754 = vmatprep.subr.mxu0 0.0
        %1755 = vmatpush1.msra.mxu0 0.0
        %1756 = vmatprep.subr.mxu0 0.0
        %1757 = vmatpush1.msra.mxu0 0.0
        %1758 = vmatprep.subr.mxu0 0.0
        %1759 = vmatpush1.msra.mxu0 0.0
        %1760 = vmatprep.subr.mxu0 0.0
        %1761 = vmatpush1.msra.mxu0 0.0
        %1762 = vmatprep.subr.mxu0 0.0
        %1763 = vmatpush1.msra.mxu0 0.0
        %1764 = vmatprep.subr.mxu0 0.0
        %1765 = vmatpush1.msra.mxu0 0.0
        %1766 = vmatprep.subr.mxu0 0.0
        %1767 = vmatpush1.msra.mxu0 0.0
        %1768 = vmatprep.subr.mxu0 0.0
        %1769 = vmatpush1.msra.mxu0 0.0
        %1770 = vmatprep.subr.mxu0 0.0
        %1771 = vmatpush1.msra.mxu0 0.0
        %1772 = vmatprep.subr.mxu0 0.0
        %1773 = vmatpush1.msra.mxu0 0.0
        %1774 = vmatprep.subr.mxu0 0.0
        %1775 = vmatpush1.msra.mxu0 0.0
        %1776 = vmatprep.subr.mxu0 0.0
        %1777 = vmatpush1.msra.mxu0 0.0
        %1778 = vmatprep.subr.mxu0 0.0
        %1779 = vmatpush1.msra.mxu0 0.0
        %1780 = vmatprep.subr.mxu0 0.0
        %1781 = vmatpush1.msra.mxu0 0.0
        %1782 = vmatprep.subr.mxu0 0.0
        %1783 = vmatpush1.msra.mxu0 0.0
        %1784 = vmatprep.subr.mxu0 0.0
        %1785 = vmatpush1.msra.mxu0 0.0
        %1786 = vmatprep.subr.mxu0 0.0
        %1787 = vmatpush1.msra.mxu0 0.0
        %1788 = vmatprep.subr.mxu0 0.0
        %1789 = vmatpush1.msra.mxu0 0.0
        %1790 = vmatprep.subr.mxu0 0.0
        %1791 = vmatpush1.msra.mxu0 0.0
        %1792 = vmatprep.subr.mxu0 0.0
        %1793 = vmatpush1.msra.mxu0 0.0
        %1794 = vmatprep.subr.mxu0 0.0
        %1795 = vmatpush1.msra.mxu0 0.0
        %1796 = vmatprep.subr.mxu0 0.0
        %1797 = vmatpush1.msra.mxu0 0.0
        %1798 = vmatprep.subr.mxu0 0.0
        %1799 = vmatpush1.msra.mxu0 0.0
        %1800 = vmatprep.subr.mxu0 0.0
        %1801 = vmatpush1.msra.mxu0 0.0
        %1802 = vmatprep.subr.mxu0 0.0
        %1803 = vmatpush1.msra.mxu0 0.0
        %1804 = vmatprep.subr.mxu0 0.0
        %1805 = vmatpush1.msra.mxu0 0.0
        %1806 = vmatprep.subr.mxu0 0.0
        %1807 = vmatpush1.msra.mxu0 0.0
        %1808 = vmatprep.subr.mxu0 0.0
        %1809 = vmatpush1.msra.mxu0 0.0
        %1810 = vmatprep.subr.mxu0 0.0
        %1811 = vmatpush1.msra.mxu0 0.0
        %1812 = vmatprep.mubr.f32.mxu0 0.0
        %1813 = vmatmul.mubr.f32.gmra.mrb[0].mxu0 %v1746
        %v1814 = vpop.f32.mrb[0].mxu0
        %v1815 = vadd.f32 0.0, %v1814
        %v1816 = vpop.f32.mrb[0].mxu0
        %1817 = vdwg.mxu0
        %1818 = vmatprep.subr.mxu0 0.0
        %1819 = vmatpush1.msra.mxu0 %v1743
        %1820 = vmatprep.subr.mxu0 0.0
        %1821 = vmatpush1.msra.mxu0 0.0
        %1822 = vmatprep.subr.mxu0 0.0
        %1823 = vmatpush1.msra.mxu0 0.0
        %1824 = vmatprep.subr.mxu0 0.0
        %1825 = vmatpush1.msra.mxu0 0.0
        %1826 = vmatprep.subr.mxu0 0.0
        %1827 = vmatpush1.msra.mxu0 0.0
        %1828 = vmatprep.subr.mxu0 0.0
        %1829 = vmatpush1.msra.mxu0 0.0
        %1830 = vmatprep.subr.mxu0 0.0
        %1831 = vmatpush1.msra.mxu0 0.0
        %1832 = vmatprep.subr.mxu0 0.0
        %1833 = vmatpush1.msra.mxu0 0.0
        %1834 = vmatprep.subr.mxu0 0.0
        %1835 = vmatpush1.msra.mxu0 0.0
        %1836 = vmatprep.subr.mxu0 0.0
        %1837 = vmatpush1.msra.mxu0 0.0
        %1838 = vmatprep.subr.mxu0 0.0
        %1839 = vmatpush1.msra.mxu0 0.0
        %1840 = vmatprep.subr.mxu0 0.0
        %1841 = vmatpush1.msra.mxu0 0.0
        %1842 = vmatprep.subr.mxu0 0.0
        %1843 = vmatpush1.msra.mxu0 0.0
        %1844 = vmatprep.subr.mxu0 0.0
        %1845 = vmatpush1.msra.mxu0 0.0
        %1846 = vmatprep.subr.mxu0 0.0
        %1847 = vmatpush1.msra.mxu0 0.0
        %1848 = vmatprep.subr.mxu0 0.0
        %1849 = vmatpush1.msra.mxu0 0.0
        %1850 = vmatprep.subr.mxu0 0.0
        %1851 = vmatpush1.msra.mxu0 0.0
        %1852 = vmatprep.subr.mxu0 0.0
        %1853 = vmatpush1.msra.mxu0 0.0
        %1854 = vmatprep.subr.mxu0 0.0
        %1855 = vmatpush1.msra.mxu0 0.0
        %1856 = vmatprep.subr.mxu0 0.0
        %1857 = vmatpush1.msra.mxu0 0.0
        %1858 = vmatprep.subr.mxu0 0.0
        %1859 = vmatpush1.msra.mxu0 0.0
        %1860 = vmatprep.subr.mxu0 0.0
        %1861 = vmatpush1.msra.mxu0 0.0
        %1862 = vmatprep.subr.mxu0 0.0
        %1863 = vmatpush1.msra.mxu0 0.0
        %1864 = vmatprep.subr.mxu0 0.0
        %1865 = vmatpush1.msra.mxu0 0.0
        %1866 = vmatprep.subr.mxu0 0.0
        %1867 = vmatpush1.msra.mxu0 0.0
        %1868 = vmatprep.subr.mxu0 0.0
        %1869 = vmatpush1.msra.mxu0 0.0
        %1870 = vmatprep.subr.mxu0 0.0
        %1871 = vmatpush1.msra.mxu0 0.0
        %1872 = vmatprep.subr.mxu0 0.0
        %1873 = vmatpush1.msra.mxu0 0.0
        %1874 = vmatprep.subr.mxu0 0.0
        %1875 = vmatpush1.msra.mxu0 0.0
        %1876 = vmatprep.subr.mxu0 0.0
        %1877 = vmatpush1.msra.mxu0 0.0
        %1878 = vmatprep.subr.mxu0 0.0
        %1879 = vmatpush1.msra.mxu0 0.0
        %1880 = vmatprep.subr.mxu0 0.0
        %1881 = vmatpush1.msra.mxu0 0.0
        %1882 = vmatprep.mubr.f32.mxu0 0.0
        %1883 = vmatmul.mubr.f32.gmra.mrb[0].mxu0 %v1746
        %v1884 = vpop.f32.mrb[0].mxu0
        %v1885 = vadd.f32 0.0, %v1884
        %v1886 = vpop.f32.mrb[0].mxu0
        %1887 = vdwg.mxu0
        %v1888 = vmul.f32 %v1815, %v1815
        %v1889 = vsub.f32 %v1885, %v1888
        %v1890 = vadd.f32 %v1889, 1e-05
        %v1891 = vrsqrt.pop %v1890
        %1893 = vset.pattern.permute.xlu0 0
        %1894 = vperm.xlu0 %1893, %v1815
        %v1895 = vpop.permute.xlu0 %1894
        %v1897 = vsub.f32 %v1710, %v1895
        %v1898 = vsub.f32 %v1711, %v1895
        %v1899 = vsub.f32 %v1712, %v1895
        %v1900 = vld [vmem:[%s2] sm:$0xff]
        %v1901 = vmul.f32 %v1891, %v1900
        %1903 = vset.pattern.permute.xlu0 0
        %1904 = vperm.xlu0 %1903, %v1901
        %v1905 = vpop.permute.xlu0 %1904
        %v1907 = vmul.f32 %v1897, %v1905
        %v1908 = vmul.f32 %v1898, %v1905
        %v1909 = vmul.f32 %v1899, %v1905
        %v1910 = vld [vmem:[%s3] sm:$0xff]
        %1912 = vset.pattern.permute.xlu0 0
        %1913 = vperm.xlu0 %1912, %v1910
        %v1914 = vpop.permute.xlu0 %1913
        %v1916 = vadd.f32 %v1907, %v1914
        %v1917 = vadd.f32 %v1908, %v1914
        %v1918 = vadd.f32 %v1909, %v1914
        %v1919 = vmax.f32 %v1916, 0.0
        %v1920 = vmax.f32 %v1917, 0.0
        %v1921 = vmax.f32 %v1918, 0.0
        %1922 = vst [vmem:[%s244] sm:$0xff] %v1919
        %1923 = vst [vmem:[%s244 + $0x8] sm:$0xff] %v1920
        %1924 = vst [vmem:[%s244 + $0x10] sm:$0xff] %v1921
        %s1925 = sand.u32 %s159, 1
        %s1926 = scalar_lea.sflag [#allocation3], %s1925
        %s1927 = sand.u32 %s159, 1
        %s1928 = smul.addr %s1927, 24
        %s1929 = scalar_lea.vmem [#allocation2], %s1928
        // Predicated region
        $region45: #{tpu_custom_call.1} parent=43 // pred_check
          %p1930 = pneg %p169
        $region46: #{tpu_custom_call.1} parent=43 // pred_check_branch
          %1932 = sbr.rel (%p1930) target = $region48
        $region47: #{tpu_custom_call.1} parent=43 // pred_region
          %s1934 = ssub.s32 384, 384
          %1935 = vsyncadd %s1926, %s1934
          %s1936 = smul.addr %s20, 3
          %s1937 = smul.addr %s1936, 128
          %s1938 = scalar_lea.hbm %s6, %s1937
          %s1940 = sshll.u32 %s1929, 4
          %s1941 = int_to_ptr.vmem [resolvable:$true] %s1940
          %1943 = dma.vmem_to_hbm [thread:$0]  %s1941, 384, %s1938, %s1926
        $region48: #{tpu_custom_call.1} parent=43 // pred_fallthru
          _
      $region44: #{tpu_custom_call.1} parent=5 // pred_fallthru
        _
      %p1944 = scmp.le.s32.totalorder 2, %s15
      // Predicated region
      $region49: #{tpu_custom_call.1} parent=5 // pred_check
        %p1945 = pneg %p1944
      $region50: #{tpu_custom_call.1} parent=5 // pred_check_branch
        %1947 = sbr.rel (%p1945) target = $region52
      $region51: #{tpu_custom_call.1} parent=5 // pred_region
        %s1948 = ssub.s32 %s15, 2
        // Predicated region
        $region53: #{tpu_custom_call.1} parent=51 // pred_check
          %p1949 = pneg %p175
        $region54: #{tpu_custom_call.1} parent=51 // pred_check_branch
          %1951 = sbr.rel (%p1949) target = $region56
        $region55: #{tpu_custom_call.1} parent=51 // pred_region
          %s1952 = sand.u32 %s160, 1
          %s1953 = scalar_lea.sflag [#allocation3], %s1952
          %s1954 = sand.u32 %s160, 1
          %s1955 = smul.addr %s1954, 24
          %s1956 = scalar_lea.vmem [#allocation2], %s1955
          %1957 = dma.done %s1953, 384
        $region56: #{tpu_custom_call.1} parent=51 // pred_fallthru
          _
      $region52: #{tpu_custom_call.1} parent=5 // pred_fallthru
        _
    $region6: #{tpu_custom_call.1} parent=1 // loop_footer
      %s19 = sadd.s32 1, %s15
    $region7: #{tpu_custom_call.1} parent=1 // loop_footer_branch
      %14 = sbr.rel target = $region3
    $region8: #{tpu_custom_call.1} parent=1 // loop_exit
      _
    %1958 = vsyncpa [#allocation3], 1
    %s1959 = scalar_lea.sflag [#allocation3], 1
    %1960 = vsyncpa %s1959, 1

</llo_original>
